<compile_context>
chip_gen: v7x
topology: tpu7x:2x2x1
jax: 0.10.0
libtpu: 0.0.40
codegen_flags: <defaults>
</compile_context>

<pallas_src>
import functools
import math

import jax
import jax.numpy as jnp
from jax import lax
from jax.experimental import pallas as pl
from jax.experimental.pallas import tpu as pltpu


# ----------------------------------------------------------------------------- #
# Kernel
# ----------------------------------------------------------------------------- #
def _layernorm(x, gamma, beta, eps=1e-5):
    # Matches torch.nn.LayerNorm: biased variance over last dim, eps inside sqrt.
    mu = jnp.mean(x, axis=-1, keepdims=True)
    var = jnp.mean((x - mu) ** 2, axis=-1, keepdims=True)
    return (x - mu) * lax.rsqrt(var + eps) * gamma + beta


def transformer_kernel(
    ids_ref,    # (R, 1)            int32  flattened token ids, R = N*T
    emb_ref,    # (V, H)            f32    token-embedding table
    wqkv_ref,   # (H, 2*(dq+dk+dv)) md     fused [q1|k1|v1|q2|k2|v2] (q pre-scaled)
    bqkv_ref,   # (1, 2*(dq+dk+dv)) f32    fused biases (q biases pre-scaled)
    wp_ref,     # (2*dv, H)         md     attention-head projection
    w1_ref,     # (H, Dff)          md     feed-forward 1
    b1_ref,     # (1, Dff)          f32
    w2_ref,     # (Dff, H)          md     feed-forward 2
    vecs_ref,   # (8+T, H)          f32    rows: bp,g_mh,b_mh,b2,g_ff,b_ff,wf^T,[bf,0..],pos[0:T]
    o_ref,      # (N, 1)            f32    output probabilities
    *, n_seq, seq, dim_k, dim_v, vocab, matmul_dtype,
):
    md = matmul_dtype
    R = n_seq * seq

    # ---- embedding lookup as an exact one-hot matmul (small vocab) ----
    ids = ids_ref[...]                                                    # (R, 1) int32
    onehot = (ids == lax.broadcasted_iota(jnp.int32, (R, vocab), 1)).astype(jnp.float32)
    x = jnp.dot(onehot, emb_ref[...], preferred_element_type=jnp.float32)  # (R, H) f32

    pos = vecs_ref[8:8 + seq, :]                                          # (T, H)
    x = x + jnp.concatenate([pos] * n_seq, axis=0)                        # broadcast over batch

    # ---- fused QKV for both heads: one lane-dense matmul, then static lane slices ----
    x_md = x.astype(md)                                                   # cast hoisted (1 use)
    qkv = jnp.dot(x_md, wqkv_ref[...], preferred_element_type=jnp.float32) + bqkv_ref[...]
    d, dv = dim_k, dim_v
    q1 = qkv[:, 0:d]
    k1 = qkv[:, d:2 * d]
    v1 = qkv[:, 2 * d:2 * d + dv]
    off = 2 * d + dv
    q2 = qkv[:, off:off + d]
    k2 = qkv[:, off + d:off + 2 * d]
    v2 = qkv[:, off + 2 * d:off + 2 * d + dv]

    # ---- block-diagonal mask over the flattened (R, R) scores (no integer division) ----
    ri = lax.broadcasted_iota(jnp.int32, (R, n_seq), 0)
    ci = lax.broadcasted_iota(jnp.int32, (R, n_seq), 1)
    member = ((ri >= ci * seq) & (ri < (ci + 1) * seq)).astype(jnp.float32)   # (R, n_seq)
    same_seq = lax.dot_general(member, member, (((1,), (1,)), ((), ())),
                               preferred_element_type=jnp.float32)            # (R, R)
    neg_big = jnp.float32(-1e30)

    def head(q, k, v):
        # Contract on the feature dim directly (no k.T relayout).
        s = lax.dot_general(q.astype(md), k.astype(md), (((1,), (1,)), ((), ())),
                            preferred_element_type=jnp.float32)               # (R, R)
        s = jnp.where(same_seq > 0.5, s, neg_big)                             # per-sequence mask
        s = s - jnp.max(s, axis=-1, keepdims=True)                            # stable softmax
        p = jnp.exp(s)
        p = p * pl.reciprocal(jnp.sum(p, axis=-1, keepdims=True), approx=True)
        return jnp.dot(p.astype(md), v.astype(md), preferred_element_type=jnp.float32)

    a1 = head(q1, k1, v1)                                                 # (R, dv)
    a2 = head(q2, k2, v2)                                                 # (R, dv)

    # Head projection of concat([a1, a2]) as a split matmul: sublane ref-slices of wp are free.
    proj = (jnp.dot(a1.astype(md), wp_ref[0:dv, :], preferred_element_type=jnp.float32)
            + jnp.dot(a2.astype(md), wp_ref[dv:2 * dv, :], preferred_element_type=jnp.float32)
            + vecs_ref[0:1, :])                                           # + bp -> (R, H)

    h = _layernorm(x + proj, vecs_ref[1:2, :], vecs_ref[2:3, :])          # (R, H)

    ff = jnp.dot(h.astype(md), w1_ref[...], preferred_element_type=jnp.float32) + b1_ref[...]
    ff = jnp.maximum(ff, 0.0)
    ff = jnp.dot(ff.astype(md), w2_ref[...], preferred_element_type=jnp.float32) + vecs_ref[3:4, :]

    y = _layernorm(ff + h, vecs_ref[4:5, :], vecs_ref[5:6, :])            # (R, H)

    # ---- fused classification head: token 0 of each sequence -> linear -> sigmoid ----
    rj = lax.broadcasted_iota(jnp.int32, (n_seq, R), 1)
    bj = lax.broadcasted_iota(jnp.int32, (n_seq, R), 0)
    sel = (rj == bj * seq).astype(jnp.float32)                            # (N, R) row-0 selector
    cls = jnp.dot(sel, y, preferred_element_type=jnp.float32)             # (N, H)
    wf_row = vecs_ref[6:7, :]                                             # (1, H)
    bf = vecs_ref[7:8, 0:1]                                               # (1, 1)
    logits = jnp.sum(cls * wf_row, axis=-1, keepdims=True) + bf           # (N, 1)
    o_ref[...] = jax.nn.sigmoid(logits)


# ----------------------------------------------------------------------------- #
# Wrapper
# ----------------------------------------------------------------------------- #
def classification_transformer(tokens, params, *, dim_k, dim_v,
                               matmul_dtype=jnp.bfloat16):
    """Forward pass. tokens: (N, T) int32.  Returns (N, 1) probabilities.

    matmul_dtype: bfloat16 (default) feeds the MXU its native fast path on
    v5e/v6e/v7x with f32 accumulation; use jnp.float32 for exact parity with
    the f32 PyTorch reference.
    """
    N, T = tokens.shape
    tok_emb = params["tok_emb"].astype(jnp.float32)
    V, H = tok_emb.shape
    dim_ff = params["w1"].shape[-1]
    md = matmul_dtype
    scale = 1.0 / math.sqrt(dim_k)

    # ---- one-time weight prep (layout plumbing outside the hot path) ----
    # Fused QKV weight/bias with the 1/sqrt(dim_k) score scale folded into Q.
    w_qkv = jnp.concatenate(
        [params["wq1"] * scale, params["wk1"], params["wv1"],
         params["wq2"] * scale, params["wk2"], params["wv2"]], axis=1).astype(md)
    b_qkv = jnp.concatenate(
        [params["bq1"] * scale, params["bk1"], params["bv1"],
         params["bq2"] * scale, params["bk2"], params["bv2"]], axis=1).astype(jnp.float32)
    wp = params["wp"].astype(md)          # (2*dim_v, H)
    w1 = params["w1"].astype(md)          # (H, Dff)
    b1 = params["b1"].astype(jnp.float32)
    w2 = params["w2"].astype(md)          # (Dff, H)

    # Stack every width-H vector + the positional table into one f32 input.
    bf_row = jnp.zeros((1, H), jnp.float32).at[0, 0].set(params["bf"][0, 0])
    vecs = jnp.concatenate(
        [params["bp"], params["g_mh"], params["b_mh"], params["b2"],
         params["g_ff"], params["b_ff"], params["wf"].T, bf_row,
         params["pos_emb"][:T]], axis=0).astype(jnp.float32)          # (8+T, H)

    ids = tokens.reshape(N * T, 1).astype(jnp.int32)                  # flattened once, host-side

    inputs = [ids, tok_emb, w_qkv, b_qkv, wp, w1, b1, w2, vecs]

    def full_spec(a):
        nd = a.ndim
        return pl.BlockSpec(a.shape, lambda g, _nd=nd: (0,) * _nd)

    in_specs = [full_spec(a) for a in inputs]

    # Advisory cost estimate for XLA's scheduler.
    R = N * T
    flops = (
        2 * R * V * H                              # one-hot embedding matmul
        + 2 * R * H * (4 * dim_k + 2 * dim_v)      # fused QKV
        + 2 * 2 * R * R * (dim_k + dim_v)          # scores + PV, 2 heads
        + 2 * R * R * N                            # block-diagonal mask matmul
        + 2 * R * (2 * dim_v) * H                  # head projection
        + 2 * R * H * dim_ff * 2                   # feed-forward
        + 2 * N * R * H                            # cls-row selector matmul
        + 2 * N * H                                # final linear
    )
    bytes_accessed = sum(int(a.size) * a.dtype.itemsize for a in inputs) + N * 4
    cost = pl.CostEstimate(flops=flops,
                           transcendentals=2 * R * R + 4 * R + N,
                           bytes_accessed=bytes_accessed)

    kernel = functools.partial(
        transformer_kernel, n_seq=N, seq=T, dim_k=dim_k, dim_v=dim_v,
        vocab=V, matmul_dtype=md)

    # Whole batch in a single grid step: keeps N*T rows per MXU push; do not split
    # tiny batches across TensorCores (pure regression at these shapes).
    return pl.pallas_call(
        kernel,
        out_shape=jax.ShapeDtypeStruct((N, 1), jnp.float32),
        grid=(1,),
        in_specs=in_specs,
        out_specs=pl.BlockSpec((N, 1), lambda g: (0, 0)),
        compiler_params=pltpu.CompilerParams(dimension_semantics=("arbitrary",)),
        cost_estimate=cost,
    )(*inputs)


# ----------------------------------------------------------------------------- #
# Deterministic parameter init (synthetic; shapes follow the module's __init__)
# ----------------------------------------------------------------------------- #
def init_params(key, vocab_size, max_length, hidden_dim, dim_k, dim_v, dim_ff):
    keys = iter(jax.random.split(key, 40))

    def linear(din, dout):
        lim = 1.0 / math.sqrt(din)
        w = jax.random.uniform(next(keys), (din, dout), jnp.float32, -lim, lim)
        b = jax.random.uniform(next(keys), (1, dout), jnp.float32, -lim, lim)
        return w, b

    prm = {}
    prm["tok_emb"] = jax.random.normal(next(keys), (vocab_size, hidden_dim), jnp.float32)
    prm["pos_emb"] = jax.random.normal(next(keys), (max_length, hidden_dim), jnp.float32)
    prm["wq1"], prm["bq1"] = linear(hidden_dim, dim_k)
    prm["wk1"], prm["bk1"] = linear(hidden_dim, dim_k)
    prm["wv1"], prm["bv1"] = linear(hidden_dim, dim_v)
    prm["wq2"], prm["bq2"] = linear(hidden_dim, dim_k)
    prm["wk2"], prm["bk2"] = linear(hidden_dim, dim_k)
    prm["wv2"], prm["bv2"] = linear(hidden_dim, dim_v)
    prm["wp"], prm["bp"] = linear(2 * dim_v, hidden_dim)
    prm["g_mh"] = jnp.ones((1, hidden_dim), jnp.float32)
    prm["b_mh"] = jnp.zeros((1, hidden_dim), jnp.float32)
    prm["w1"], prm["b1"] = linear(hidden_dim, dim_ff)
    prm["w2"], prm["b2"] = linear(dim_ff, hidden_dim)
    prm["g_ff"] = jnp.ones((1, hidden_dim), jnp.float32)
    prm["b_ff"] = jnp.zeros((1, hidden_dim), jnp.float32)
    prm["wf"], prm["bf"] = linear(hidden_dim, 1)
    return prm


# ----------------------------------------------------------------------------- #
if __name__ == "__main__":
    # Small shapes consistent with the module's forward: inputs are (N, T) int ids.
    # hidden_dim=128 matches the module default and is lane-dense.
    N, T = 4, 8
    HIDDEN = 128
    DIM_K = DIM_V = 64
    DIM_FF = 256
    VOCAB = 50
    MAX_LEN = 43

    key = jax.random.PRNGKey(0)
    k_tok, k_param = jax.random.split(key)

    tokens = jax.random.randint(k_tok, (N, T), 0, VOCAB, dtype=jnp.int32)
    params = init_params(k_param, VOCAB, MAX_LEN, HIDDEN, DIM_K, DIM_V, DIM_FF)

    out = classification_transformer(tokens, params, dim_k=DIM_K, dim_v=DIM_V)
    out = jax.block_until_ready(out)

    assert out.shape == (N, 1), out.shape
    assert bool(jnp.all((out >= 0.0) & (out <= 1.0)))   # sigmoid outputs
    print("KERNEL_OK")
</pallas_src>

<mosaic_0001>
module attributes {stable_mosaic.version = 11 : i64} {
  func.func @transformer_kernel(%arg0: i32, %arg1: memref<32x1xi32, #tpu.memory_space<vmem>>, %arg2: memref<50x128xf32, #tpu.memory_space<vmem>>, %arg3: memref<128x384xbf16, #tpu.memory_space<vmem>>, %arg4: memref<1x384xf32, #tpu.memory_space<vmem>>, %arg5: memref<128x128xbf16, #tpu.memory_space<vmem>>, %arg6: memref<128x256xbf16, #tpu.memory_space<vmem>>, %arg7: memref<1x256xf32, #tpu.memory_space<vmem>>, %arg8: memref<256x128xbf16, #tpu.memory_space<vmem>>, %arg9: memref<16x128xf32, #tpu.memory_space<vmem>>, %arg10: memref<4x1xf32, #tpu.memory_space<vmem>>) attributes {dimension_semantics = [#tpu.dimension_semantics<arbitrary>], iteration_bounds = array<i64: 1>, scalar_prefetch = 0 : i64, scratch_operands = 0 : i64, tpu.core_type = #tpu.core_type<tc>, window_params = [{pipeline_mode = #tpu.pipeline_mode<synchronous>, transform_indices = @transform_0, window_bounds = array<i64: 32, 1>}, {pipeline_mode = #tpu.pipeline_mode<synchronous>, transform_indices = @transform_1, window_bounds = array<i64: 50, 128>}, {pipeline_mode = #tpu.pipeline_mode<synchronous>, transform_indices = @transform_2, window_bounds = array<i64: 128, 384>}, {pipeline_mode = #tpu.pipeline_mode<synchronous>, transform_indices = @transform_3, window_bounds = array<i64: 1, 384>}, {pipeline_mode = #tpu.pipeline_mode<synchronous>, transform_indices = @transform_4, window_bounds = array<i64: 128, 128>}, {pipeline_mode = #tpu.pipeline_mode<synchronous>, transform_indices = @transform_5, window_bounds = array<i64: 128, 256>}, {pipeline_mode = #tpu.pipeline_mode<synchronous>, transform_indices = @transform_6, window_bounds = array<i64: 1, 256>}, {pipeline_mode = #tpu.pipeline_mode<synchronous>, transform_indices = @transform_7, window_bounds = array<i64: 256, 128>}, {pipeline_mode = #tpu.pipeline_mode<synchronous>, transform_indices = @transform_8, window_bounds = array<i64: 16, 128>}, {pipeline_mode = #tpu.pipeline_mode<synchronous>, transform_indices = @transform_9, window_bounds = array<i64: 4, 1>}]} {
    %c0 = arith.constant 0 : index
    %c0_0 = arith.constant 0 : index
    %0 = vector.load %arg1[%c0, %c0_0] : memref<32x1xi32, #tpu.memory_space<vmem>>, vector<32x1xi32>
    %1 = tpu.iota {dimensions = array<i32: 1>} : vector<32x50xi32>
    %2 = vector.broadcast %0 : vector<32x1xi32> to vector<32x50xi32>
    %3 = arith.cmpi eq, %2, %1 : vector<32x50xi32>
    %4 = arith.extui %3 : vector<32x50xi1> to vector<32x50xi32>
    %5 = arith.sitofp %4 : vector<32x50xi32> to vector<32x50xf32>
    %c0_1 = arith.constant 0 : index
    %c0_2 = arith.constant 0 : index
    %6 = vector.load %arg2[%c0_1, %c0_2] : memref<50x128xf32, #tpu.memory_space<vmem>>, vector<50x128xf32>
    %cst = arith.constant dense<0.000000e+00> : vector<32x128xf32>
    %7 = tpu.matmul %5, %6, %cst {dimension_numbers = #tpu.dot_dimension_numbers<[1], [0], [0], [1], [0, 0, 1, 1], [], []>} : vector<32x50xf32>, vector<50x128xf32>, vector<32x128xf32> -> vector<32x128xf32>
    %c8 = arith.constant 8 : index
    %c0_3 = arith.constant 0 : index
    %8 = vector.load %arg9[%c8, %c0_3] : memref<16x128xf32, #tpu.memory_space<vmem>>, vector<8x128xf32>
    %9 = tpu.concatenate %8, %8, %8, %8 in 0 : vector<8x128xf32>, vector<8x128xf32>, vector<8x128xf32>, vector<8x128xf32> -> vector<32x128xf32>
    %10 = arith.addf %7, %9 : vector<32x128xf32>
    %11 = arith.truncf %10 : vector<32x128xf32> to vector<32x128xbf16>
    %c0_4 = arith.constant 0 : index
    %c0_5 = arith.constant 0 : index
    %12 = vector.load %arg3[%c0_4, %c0_5] : memref<128x384xbf16, #tpu.memory_space<vmem>>, vector<128x384xbf16>
    %cst_6 = arith.constant dense<0.000000e+00> : vector<32x384xf32>
    %13 = tpu.matmul %11, %12, %cst_6 {dimension_numbers = #tpu.dot_dimension_numbers<[1], [0], [0], [1], [0, 0, 1, 1], [], []>} : vector<32x128xbf16>, vector<128x384xbf16>, vector<32x384xf32> -> vector<32x384xf32>
    %c0_7 = arith.constant 0 : index
    %c0_8 = arith.constant 0 : index
    %14 = vector.load %arg4[%c0_7, %c0_8] : memref<1x384xf32, #tpu.memory_space<vmem>>, vector<1x384xf32>
    %15 = vector.broadcast %14 : vector<1x384xf32> to vector<32x384xf32>
    %16 = arith.addf %13, %15 : vector<32x384xf32>
    %17 = vector.extract_strided_slice %16 {offsets = [0, 0], sizes = [32, 64], strides = [1, 1]} : vector<32x384xf32> to vector<32x64xf32>
    %18 = vector.extract_strided_slice %16 {offsets = [0, 64], sizes = [32, 64], strides = [1, 1]} : vector<32x384xf32> to vector<32x64xf32>
    %19 = vector.extract_strided_slice %16 {offsets = [0, 128], sizes = [32, 64], strides = [1, 1]} : vector<32x384xf32> to vector<32x64xf32>
    %20 = vector.extract_strided_slice %16 {offsets = [0, 192], sizes = [32, 64], strides = [1, 1]} : vector<32x384xf32> to vector<32x64xf32>
    %21 = vector.extract_strided_slice %16 {offsets = [0, 256], sizes = [32, 64], strides = [1, 1]} : vector<32x384xf32> to vector<32x64xf32>
    %22 = vector.extract_strided_slice %16 {offsets = [0, 320], sizes = [32, 64], strides = [1, 1]} : vector<32x384xf32> to vector<32x64xf32>
    %23 = tpu.iota {dimensions = array<i32: 0>} : vector<32x4xi32>
    %24 = tpu.iota {dimensions = array<i32: 1>} : vector<32x4xi32>
    %c8_i32 = arith.constant 8 : i32
    %25 = vector.broadcast %c8_i32 : i32 to vector<32x4xi32>
    %26 = arith.muli %24, %25 : vector<32x4xi32>
    %27 = arith.cmpi sge, %23, %26 : vector<32x4xi32>
    %c1_i32 = arith.constant 1 : i32
    %28 = vector.broadcast %c1_i32 : i32 to vector<32x4xi32>
    %29 = arith.addi %24, %28 : vector<32x4xi32>
    %c8_i32_9 = arith.constant 8 : i32
    %30 = vector.broadcast %c8_i32_9 : i32 to vector<32x4xi32>
    %31 = arith.muli %29, %30 : vector<32x4xi32>
    %32 = arith.cmpi slt, %23, %31 : vector<32x4xi32>
    %33 = arith.andi %27, %32 : vector<32x4xi1>
    %34 = arith.extui %33 : vector<32x4xi1> to vector<32x4xi32>
    %35 = arith.sitofp %34 : vector<32x4xi32> to vector<32x4xf32>
    %cst_10 = arith.constant dense<0.000000e+00> : vector<32x32xf32>
    %36 = tpu.matmul %35, %35, %cst_10 {dimension_numbers = #tpu.dot_dimension_numbers<[1], [1], [0], [0], [0, 0, 1, 0], [], []>} : vector<32x4xf32>, vector<32x4xf32>, vector<32x32xf32> -> vector<32x32xf32>
    %37 = arith.truncf %17 : vector<32x64xf32> to vector<32x64xbf16>
    %38 = arith.truncf %18 : vector<32x64xf32> to vector<32x64xbf16>
    %cst_11 = arith.constant dense<0.000000e+00> : vector<32x32xf32>
    %39 = tpu.matmul %37, %38, %cst_11 {dimension_numbers = #tpu.dot_dimension_numbers<[1], [1], [0], [0], [0, 0, 1, 0], [], []>} : vector<32x64xbf16>, vector<32x64xbf16>, vector<32x32xf32> -> vector<32x32xf32>
    %cst_12 = arith.constant 5.000000e-01 : f32
    %40 = vector.broadcast %cst_12 : f32 to vector<32x32xf32>
    %41 = arith.cmpf ogt, %36, %40 : vector<32x32xf32>
    %cst_13 = arith.constant -1.000000e+30 : f32
    %42 = vector.broadcast %cst_13 : f32 to vector<32x32xf32>
    %43 = arith.select %41, %39, %42 : vector<32x32xi1>, vector<32x32xf32>
    %cst_14 = arith.constant dense<0xFF800000> : vector<32xf32>
    %44 = vector.multi_reduction <maximumf>, %43, %cst_14 [1] : vector<32x32xf32> to vector<32xf32>
    %45 = vector.shape_cast %44 : vector<32xf32> to vector<32x1xf32>
    %46 = vector.broadcast %45 : vector<32x1xf32> to vector<32x32xf32>
    %47 = arith.subf %43, %46 : vector<32x32xf32>
    %48 = math.exp %47 : vector<32x32xf32>
    %cst_15 = arith.constant dense<0.000000e+00> : vector<32xf32>
    %49 = vector.multi_reduction <add>, %48, %cst_15 [1] : vector<32x32xf32> to vector<32xf32>
    %50 = vector.shape_cast %49 : vector<32xf32> to vector<32x1xf32>
    %51 = tpu.reciprocal %50 {approx = true} : vector<32x1xf32> -> vector<32x1xf32>
    %52 = vector.broadcast %51 : vector<32x1xf32> to vector<32x32xf32>
    %53 = arith.mulf %48, %52 : vector<32x32xf32>
    %54 = arith.truncf %53 : vector<32x32xf32> to vector<32x32xbf16>
    %55 = arith.truncf %19 : vector<32x64xf32> to vector<32x64xbf16>
    %cst_16 = arith.constant dense<0.000000e+00> : vector<32x64xf32>
    %56 = tpu.matmul %54, %55, %cst_16 {dimension_numbers = #tpu.dot_dimension_numbers<[1], [0], [0], [1], [0, 0, 1, 1], [], []>} : vector<32x32xbf16>, vector<32x64xbf16>, vector<32x64xf32> -> vector<32x64xf32>
    %57 = arith.truncf %20 : vector<32x64xf32> to vector<32x64xbf16>
    %58 = arith.truncf %21 : vector<32x64xf32> to vector<32x64xbf16>
    %cst_17 = arith.constant dense<0.000000e+00> : vector<32x32xf32>
    %59 = tpu.matmul %57, %58, %cst_17 {dimension_numbers = #tpu.dot_dimension_numbers<[1], [1], [0], [0], [0, 0, 1, 0], [], []>} : vector<32x64xbf16>, vector<32x64xbf16>, vector<32x32xf32> -> vector<32x32xf32>
    %cst_18 = arith.constant 5.000000e-01 : f32
    %60 = vector.broadcast %cst_18 : f32 to vector<32x32xf32>
    %61 = arith.cmpf ogt, %36, %60 : vector<32x32xf32>
    %cst_19 = arith.constant -1.000000e+30 : f32
    %62 = vector.broadcast %cst_19 : f32 to vector<32x32xf32>
    %63 = arith.select %61, %59, %62 : vector<32x32xi1>, vector<32x32xf32>
    %cst_20 = arith.constant dense<0xFF800000> : vector<32xf32>
    %64 = vector.multi_reduction <maximumf>, %63, %cst_20 [1] : vector<32x32xf32> to vector<32xf32>
    %65 = vector.shape_cast %64 : vector<32xf32> to vector<32x1xf32>
    %66 = vector.broadcast %65 : vector<32x1xf32> to vector<32x32xf32>
    %67 = arith.subf %63, %66 : vector<32x32xf32>
    %68 = math.exp %67 : vector<32x32xf32>
    %cst_21 = arith.constant dense<0.000000e+00> : vector<32xf32>
    %69 = vector.multi_reduction <add>, %68, %cst_21 [1] : vector<32x32xf32> to vector<32xf32>
    %70 = vector.shape_cast %69 : vector<32xf32> to vector<32x1xf32>
    %71 = tpu.reciprocal %70 {approx = true} : vector<32x1xf32> -> vector<32x1xf32>
    %72 = vector.broadcast %71 : vector<32x1xf32> to vector<32x32xf32>
    %73 = arith.mulf %68, %72 : vector<32x32xf32>
    %74 = arith.truncf %73 : vector<32x32xf32> to vector<32x32xbf16>
    %75 = arith.truncf %22 : vector<32x64xf32> to vector<32x64xbf16>
    %cst_22 = arith.constant dense<0.000000e+00> : vector<32x64xf32>
    %76 = tpu.matmul %74, %75, %cst_22 {dimension_numbers = #tpu.dot_dimension_numbers<[1], [0], [0], [1], [0, 0, 1, 1], [], []>} : vector<32x32xbf16>, vector<32x64xbf16>, vector<32x64xf32> -> vector<32x64xf32>
    %77 = arith.truncf %56 : vector<32x64xf32> to vector<32x64xbf16>
    %c0_23 = arith.constant 0 : index
    %c0_24 = arith.constant 0 : index
    %78 = vector.load %arg5[%c0_23, %c0_24] : memref<128x128xbf16, #tpu.memory_space<vmem>>, vector<64x128xbf16>
    %cst_25 = arith.constant dense<0.000000e+00> : vector<32x128xf32>
    %79 = tpu.matmul %77, %78, %cst_25 {dimension_numbers = #tpu.dot_dimension_numbers<[1], [0], [0], [1], [0, 0, 1, 1], [], []>} : vector<32x64xbf16>, vector<64x128xbf16>, vector<32x128xf32> -> vector<32x128xf32>
    %80 = arith.truncf %76 : vector<32x64xf32> to vector<32x64xbf16>
    %c64 = arith.constant 64 : index
    %c0_26 = arith.constant 0 : index
    %81 = vector.load %arg5[%c64, %c0_26] : memref<128x128xbf16, #tpu.memory_space<vmem>>, vector<64x128xbf16>
    %cst_27 = arith.constant dense<0.000000e+00> : vector<32x128xf32>
    %82 = tpu.matmul %80, %81, %cst_27 {dimension_numbers = #tpu.dot_dimension_numbers<[1], [0], [0], [1], [0, 0, 1, 1], [], []>} : vector<32x64xbf16>, vector<64x128xbf16>, vector<32x128xf32> -> vector<32x128xf32>
    %83 = arith.addf %79, %82 : vector<32x128xf32>
    %c0_28 = arith.constant 0 : index
    %c0_29 = arith.constant 0 : index
    %84 = vector.load %arg9[%c0_28, %c0_29] : memref<16x128xf32, #tpu.memory_space<vmem>>, vector<1x128xf32>
    %85 = vector.broadcast %84 : vector<1x128xf32> to vector<32x128xf32>
    %86 = arith.addf %83, %85 : vector<32x128xf32>
    %87 = arith.addf %10, %86 : vector<32x128xf32>
    %c1 = arith.constant 1 : index
    %c0_30 = arith.constant 0 : index
    %88 = vector.load %arg9[%c1, %c0_30] : memref<16x128xf32, #tpu.memory_space<vmem>>, vector<1x128xf32>
    %c2 = arith.constant 2 : index
    %c0_31 = arith.constant 0 : index
    %89 = vector.load %arg9[%c2, %c0_31] : memref<16x128xf32, #tpu.memory_space<vmem>>, vector<1x128xf32>
    %cst_32 = arith.constant dense<0.000000e+00> : vector<32xf32>
    %90 = vector.multi_reduction <add>, %87, %cst_32 [1] : vector<32x128xf32> to vector<32xf32>
    %91 = vector.shape_cast %90 : vector<32xf32> to vector<32x1xf32>
    %cst_33 = arith.constant 1.280000e+02 : f32
    %92 = vector.broadcast %cst_33 : f32 to vector<32x1xf32>
    %93 = arith.divf %91, %92 : vector<32x1xf32>
    %94 = vector.broadcast %93 : vector<32x1xf32> to vector<32x128xf32>
    %95 = arith.subf %87, %94 : vector<32x128xf32>
    %96 = arith.mulf %95, %95 : vector<32x128xf32>
    %cst_34 = arith.constant dense<0.000000e+00> : vector<32xf32>
    %97 = vector.multi_reduction <add>, %96, %cst_34 [1] : vector<32x128xf32> to vector<32xf32>
    %98 = vector.shape_cast %97 : vector<32xf32> to vector<32x1xf32>
    %cst_35 = arith.constant 1.280000e+02 : f32
    %99 = vector.broadcast %cst_35 : f32 to vector<32x1xf32>
    %100 = arith.divf %98, %99 : vector<32x1xf32>
    %101 = vector.broadcast %93 : vector<32x1xf32> to vector<32x128xf32>
    %102 = arith.subf %87, %101 : vector<32x128xf32>
    %cst_36 = arith.constant 9.99999974E-6 : f32
    %103 = vector.broadcast %cst_36 : f32 to vector<32x1xf32>
    %104 = arith.addf %100, %103 : vector<32x1xf32>
    %105 = math.rsqrt %104 : vector<32x1xf32>
    %106 = vector.broadcast %105 : vector<32x1xf32> to vector<32x128xf32>
    %107 = arith.mulf %102, %106 : vector<32x128xf32>
    %108 = vector.broadcast %88 : vector<1x128xf32> to vector<32x128xf32>
    %109 = arith.mulf %107, %108 : vector<32x128xf32>
    %110 = vector.broadcast %89 : vector<1x128xf32> to vector<32x128xf32>
    %111 = arith.addf %109, %110 : vector<32x128xf32>
    %112 = arith.truncf %111 : vector<32x128xf32> to vector<32x128xbf16>
    %c0_37 = arith.constant 0 : index
    %c0_38 = arith.constant 0 : index
    %113 = vector.load %arg6[%c0_37, %c0_38] : memref<128x256xbf16, #tpu.memory_space<vmem>>, vector<128x256xbf16>
    %cst_39 = arith.constant dense<0.000000e+00> : vector<32x256xf32>
    %114 = tpu.matmul %112, %113, %cst_39 {dimension_numbers = #tpu.dot_dimension_numbers<[1], [0], [0], [1], [0, 0, 1, 1], [], []>} : vector<32x128xbf16>, vector<128x256xbf16>, vector<32x256xf32> -> vector<32x256xf32>
    %c0_40 = arith.constant 0 : index
    %c0_41 = arith.constant 0 : index
    %115 = vector.load %arg7[%c0_40, %c0_41] : memref<1x256xf32, #tpu.memory_space<vmem>>, vector<1x256xf32>
    %116 = vector.broadcast %115 : vector<1x256xf32> to vector<32x256xf32>
    %117 = arith.addf %114, %116 : vector<32x256xf32>
    %cst_42 = arith.constant 0.000000e+00 : f32
    %118 = vector.broadcast %cst_42 : f32 to vector<32x256xf32>
    %119 = arith.maximumf %117, %118 : vector<32x256xf32>
    %120 = arith.truncf %119 : vector<32x256xf32> to vector<32x256xbf16>
    %c0_43 = arith.constant 0 : index
    %c0_44 = arith.constant 0 : index
    %121 = vector.load %arg8[%c0_43, %c0_44] : memref<256x128xbf16, #tpu.memory_space<vmem>>, vector<256x128xbf16>
    %cst_45 = arith.constant dense<0.000000e+00> : vector<32x128xf32>
    %122 = tpu.matmul %120, %121, %cst_45 {dimension_numbers = #tpu.dot_dimension_numbers<[1], [0], [0], [1], [0, 0, 1, 1], [], []>} : vector<32x256xbf16>, vector<256x128xbf16>, vector<32x128xf32> -> vector<32x128xf32>
    %c3 = arith.constant 3 : index
    %c0_46 = arith.constant 0 : index
    %123 = vector.load %arg9[%c3, %c0_46] : memref<16x128xf32, #tpu.memory_space<vmem>>, vector<1x128xf32>
    %124 = vector.broadcast %123 : vector<1x128xf32> to vector<32x128xf32>
    %125 = arith.addf %122, %124 : vector<32x128xf32>
    %126 = arith.addf %125, %111 : vector<32x128xf32>
    %c4 = arith.constant 4 : index
    %c0_47 = arith.constant 0 : index
    %127 = vector.load %arg9[%c4, %c0_47] : memref<16x128xf32, #tpu.memory_space<vmem>>, vector<1x128xf32>
    %c5 = arith.constant 5 : index
    %c0_48 = arith.constant 0 : index
    %128 = vector.load %arg9[%c5, %c0_48] : memref<16x128xf32, #tpu.memory_space<vmem>>, vector<1x128xf32>
    %cst_49 = arith.constant dense<0.000000e+00> : vector<32xf32>
    %129 = vector.multi_reduction <add>, %126, %cst_49 [1] : vector<32x128xf32> to vector<32xf32>
    %130 = vector.shape_cast %129 : vector<32xf32> to vector<32x1xf32>
    %cst_50 = arith.constant 1.280000e+02 : f32
    %131 = vector.broadcast %cst_50 : f32 to vector<32x1xf32>
    %132 = arith.divf %130, %131 : vector<32x1xf32>
    %133 = vector.broadcast %132 : vector<32x1xf32> to vector<32x128xf32>
    %134 = arith.subf %126, %133 : vector<32x128xf32>
    %135 = arith.mulf %134, %134 : vector<32x128xf32>
    %cst_51 = arith.constant dense<0.000000e+00> : vector<32xf32>
    %136 = vector.multi_reduction <add>, %135, %cst_51 [1] : vector<32x128xf32> to vector<32xf32>
    %137 = vector.shape_cast %136 : vector<32xf32> to vector<32x1xf32>
    %cst_52 = arith.constant 1.280000e+02 : f32
    %138 = vector.broadcast %cst_52 : f32 to vector<32x1xf32>
    %139 = arith.divf %137, %138 : vector<32x1xf32>
    %140 = vector.broadcast %132 : vector<32x1xf32> to vector<32x128xf32>
    %141 = arith.subf %126, %140 : vector<32x128xf32>
    %cst_53 = arith.constant 9.99999974E-6 : f32
    %142 = vector.broadcast %cst_53 : f32 to vector<32x1xf32>
    %143 = arith.addf %139, %142 : vector<32x1xf32>
    %144 = math.rsqrt %143 : vector<32x1xf32>
    %145 = vector.broadcast %144 : vector<32x1xf32> to vector<32x128xf32>
    %146 = arith.mulf %141, %145 : vector<32x128xf32>
    %147 = vector.broadcast %127 : vector<1x128xf32> to vector<32x128xf32>
    %148 = arith.mulf %146, %147 : vector<32x128xf32>
    %149 = vector.broadcast %128 : vector<1x128xf32> to vector<32x128xf32>
    %150 = arith.addf %148, %149 : vector<32x128xf32>
    %151 = tpu.iota {dimensions = array<i32: 1>} : vector<4x32xi32>
    %152 = tpu.iota {dimensions = array<i32: 0>} : vector<4x32xi32>
    %c8_i32_54 = arith.constant 8 : i32
    %153 = vector.broadcast %c8_i32_54 : i32 to vector<4x32xi32>
    %154 = arith.muli %152, %153 : vector<4x32xi32>
    %155 = arith.cmpi eq, %151, %154 : vector<4x32xi32>
    %156 = arith.extui %155 : vector<4x32xi1> to vector<4x32xi32>
    %157 = arith.sitofp %156 : vector<4x32xi32> to vector<4x32xf32>
    %cst_55 = arith.constant dense<0.000000e+00> : vector<4x128xf32>
    %158 = tpu.matmul %157, %150, %cst_55 {dimension_numbers = #tpu.dot_dimension_numbers<[1], [0], [0], [1], [0, 0, 1, 1], [], []>} : vector<4x32xf32>, vector<32x128xf32>, vector<4x128xf32> -> vector<4x128xf32>
    %c6 = arith.constant 6 : index
    %c0_56 = arith.constant 0 : index
    %159 = vector.load %arg9[%c6, %c0_56] : memref<16x128xf32, #tpu.memory_space<vmem>>, vector<1x128xf32>
    %c7 = arith.constant 7 : index
    %c0_57 = arith.constant 0 : index
    %160 = vector.load %arg9[%c7, %c0_57] : memref<16x128xf32, #tpu.memory_space<vmem>>, vector<1x1xf32>
    %161 = vector.broadcast %159 : vector<1x128xf32> to vector<4x128xf32>
    %162 = arith.mulf %158, %161 : vector<4x128xf32>
    %cst_58 = arith.constant dense<0.000000e+00> : vector<4xf32>
    %163 = vector.multi_reduction <add>, %162, %cst_58 [1] : vector<4x128xf32> to vector<4xf32>
    %164 = vector.shape_cast %163 : vector<4xf32> to vector<4x1xf32>
    %165 = vector.broadcast %160 : vector<1x1xf32> to vector<4x1xf32>
    %166 = arith.addf %164, %165 : vector<4x1xf32>
    %167 = arith.negf %166 : vector<4x1xf32>
    %168 = math.exp %167 : vector<4x1xf32>
    %cst_59 = arith.constant 1.000000e+00 : f32
    %169 = vector.broadcast %cst_59 : f32 to vector<4x1xf32>
    %170 = arith.addf %169, %168 : vector<4x1xf32>
    %171 = arith.divf %169, %170 : vector<4x1xf32>
    %c0_60 = arith.constant 0 : index
    %c0_61 = arith.constant 0 : index
    %172 = vector.load %arg10[%c0_60, %c0_61] : memref<4x1xf32, #tpu.memory_space<vmem>>, vector<4x1xf32>
    tpu.vector_store %arg10[%c0_60, %c0_61], %171 {strides = array<i32>} : memref<4x1xf32, #tpu.memory_space<vmem>>, vector<4x1xf32>,
    return
  }
  func.func @transform_0(%arg0: i32) -> (i32, i32) {
    %c0_i32 = arith.constant 0 : i32
    %c0_i32_0 = arith.constant 0 : i32
    %c0_i32_1 = arith.constant 0 : i32
    return %c0_i32, %c0_i32_0 : i32, i32
  }
  func.func @transform_1(%arg0: i32) -> (i32, i32) {
    %c0_i32 = arith.constant 0 : i32
    %c0_i32_0 = arith.constant 0 : i32
    %c0_i32_1 = arith.constant 0 : i32
    return %c0_i32, %c0_i32_0 : i32, i32
  }
  func.func @transform_2(%arg0: i32) -> (i32, i32) {
    %c0_i32 = arith.constant 0 : i32
    %c0_i32_0 = arith.constant 0 : i32
    %c0_i32_1 = arith.constant 0 : i32
    return %c0_i32, %c0_i32_0 : i32, i32
  }
  func.func @transform_3(%arg0: i32) -> (i32, i32) {
    %c0_i32 = arith.constant 0 : i32
    %c0_i32_0 = arith.constant 0 : i32
    %c0_i32_1 = arith.constant 0 : i32
    return %c0_i32, %c0_i32_0 : i32, i32
  }
  func.func @transform_4(%arg0: i32) -> (i32, i32) {
    %c0_i32 = arith.constant 0 : i32
    %c0_i32_0 = arith.constant 0 : i32
    %c0_i32_1 = arith.constant 0 : i32
    return %c0_i32, %c0_i32_0 : i32, i32
  }
  func.func @transform_5(%arg0: i32) -> (i32, i32) {
    %c0_i32 = arith.constant 0 : i32
    %c0_i32_0 = arith.constant 0 : i32
    %c0_i32_1 = arith.constant 0 : i32
    return %c0_i32, %c0_i32_0 : i32, i32
  }
  func.func @transform_6(%arg0: i32) -> (i32, i32) {
    %c0_i32 = arith.constant 0 : i32
    %c0_i32_0 = arith.constant 0 : i32
    %c0_i32_1 = arith.constant 0 : i32
    return %c0_i32, %c0_i32_0 : i32, i32
  }
  func.func @transform_7(%arg0: i32) -> (i32, i32) {
    %c0_i32 = arith.constant 0 : i32
    %c0_i32_0 = arith.constant 0 : i32
    %c0_i32_1 = arith.constant 0 : i32
    return %c0_i32, %c0_i32_0 : i32, i32
  }
  func.func @transform_8(%arg0: i32) -> (i32, i32) {
    %c0_i32 = arith.constant 0 : i32
    %c0_i32_0 = arith.constant 0 : i32
    %c0_i32_1 = arith.constant 0 : i32
    return %c0_i32, %c0_i32_0 : i32, i32
  }
  func.func @transform_9(%arg0: i32) -> (i32, i32) {
    %c0_i32 = arith.constant 0 : i32
    %c0_i32_0 = arith.constant 0 : i32
    %c0_i32_1 = arith.constant 0 : i32
    return %c0_i32, %c0_i32_0 : i32, i32
  }
}

</mosaic_0001>

<llo_original>
// kernel: tpu_custom_call.1
$region0: #{tpu_custom_call.1}
  #allocation0 [shape = 'u32[]', space=smem, size = 0x4, offset = 0x4, fixed_abs, tag = 'smem constant byte address 0x4 - core index']
  #allocation1 [shape = 'u32[144,128]{1,0:T(1,128)}', space=vmem, size = 0x12000, scoped, tag = 'internal scratch']
  %s0 = inlined_call_operand.vmem [shape: s32[32,1], index: 0, kind: input, shape index: {}]
  %s1 = inlined_call_operand.hbm [shape: f32[50,128], index: 1, kind: input, shape index: {}]
  %s2 = inlined_call_operand.hbm [shape: bf16[128,384], index: 2, kind: input, shape index: {}]
  %s3 = inlined_call_operand.vmem [shape: f32[1,384], index: 3, kind: input, shape index: {}]
  %s4 = inlined_call_operand.hbm [shape: bf16[128,128], index: 4, kind: input, shape index: {}]
  %s5 = inlined_call_operand.hbm [shape: bf16[128,256], index: 5, kind: input, shape index: {}]
  %s6 = inlined_call_operand.vmem [shape: f32[1,256], index: 6, kind: input, shape index: {}]
  %s7 = inlined_call_operand.hbm [shape: bf16[256,128], index: 7, kind: input, shape index: {}]
  %s8 = inlined_call_operand.vmem [shape: f32[16,128], index: 8, kind: input, shape index: {}]
  %s9 = inlined_call_operand.vmem [shape: f32[4,1], index: 9, kind: output, shape index: {}]
  %s10 = sld [smem:[#allocation0]]
  $region66: #{tpu_custom_call.1} parent=0
    _
  %s12 = ssub.s32 1, %s10
  %s13 = scalar_select 0, %s12, %s10
  $region1: #{tpu_custom_call.1} parent=0
    #allocation2 [shape = 'u8[28672]{0}', space=vmem, size = 0x7000, scoped, tag = 'input window, operand 1, single buffered']
    #allocation3 [shape = 's32[1]{0}', space=sflag, size = 0x4, scoped, tag = 'scoped memory for tpu_custom_call.1']
    #allocation4 [shape = 'u8[98304]{0}', space=vmem, size = 0x18000, scoped, tag = 'input window, operand 2, single buffered']
    #allocation5 [shape = 's32[1]{0}', space=sflag, size = 0x4, scoped, tag = 'scoped memory for tpu_custom_call.1']
    #allocation6 [shape = 'u8[32768]{0}', space=vmem, size = 0x8000, scoped, tag = 'input window, operand 4, single buffered']
    #allocation7 [shape = 'u8[65536]{0}', space=vmem, size = 0x10000, scoped, tag = 'input window, operand 5, single buffered']
    #allocation8 [shape = 's32[1]{0}', space=sflag, size = 0x4, scoped, tag = 'scoped memory for tpu_custom_call.1']
    #allocation9 [shape = 'u8[65536]{0}', space=vmem, size = 0x10000, scoped, tag = 'input window, operand 7, single buffered']
    %14 = vsyncpa [#allocation3], 0
    %15 = vsyncpa [#allocation5], 0
    %16 = vsyncpa [#allocation8], 0
    // Predicated region
    $region2: #{tpu_custom_call.1} parent=1 // pred_check
      _
    $region3: #{tpu_custom_call.1} parent=1 // pred_check_branch
      %18 = sbr.rel (0) target = $region5
    $region4: #{tpu_custom_call.1} parent=1 // pred_region
      _
    $region5: #{tpu_custom_call.1} parent=1 // pred_fallthru
      _
    // Predicated region
    $region6: #{tpu_custom_call.1} parent=1 // pred_check
      _
    $region7: #{tpu_custom_call.1} parent=1 // pred_check_branch
      %20 = sbr.rel (0) target = $region9
    $region8: #{tpu_custom_call.1} parent=1 // pred_region
      %s22 = ssub.s32 896, 896
      %23 = vsyncadd [#allocation3], %s22
      %s24 = sshll.u32 [#allocation2], 4
      %s25 = int_to_ptr.vmem [resolvable:$true] %s24
      %30 = dma.hbm_to_vmem [thread:$0]  %s1, 896, %s25, [#allocation3], 128, 128, 8
    $region9: #{tpu_custom_call.1} parent=1 // pred_fallthru
      _
    // Predicated region
    $region10: #{tpu_custom_call.1} parent=1 // pred_check
      _
    $region11: #{tpu_custom_call.1} parent=1 // pred_check_branch
      %32 = sbr.rel (0) target = $region13
    $region12: #{tpu_custom_call.1} parent=1 // pred_region
      %s34 = ssub.s32 3072, 3072
      %35 = vsyncadd [#allocation5], %s34
      %s36 = sshll.u32 [#allocation4], 4
      %s37 = int_to_ptr.vmem [resolvable:$true] %s36
      %42 = dma.hbm_to_vmem [thread:$0]  %s2, 3072, %s37, [#allocation5], 192, 192, 12
    $region13: #{tpu_custom_call.1} parent=1 // pred_fallthru
      _
    // Predicated region
    $region14: #{tpu_custom_call.1} parent=1 // pred_check
      _
    $region15: #{tpu_custom_call.1} parent=1 // pred_check_branch
      %44 = sbr.rel (0) target = $region17
    $region16: #{tpu_custom_call.1} parent=1 // pred_region
      _
    $region17: #{tpu_custom_call.1} parent=1 // pred_fallthru
      _
    // Predicated region
    $region18: #{tpu_custom_call.1} parent=1 // pred_check
      _
    $region19: #{tpu_custom_call.1} parent=1 // pred_check_branch
      %46 = sbr.rel (0) target = $region21
    $region20: #{tpu_custom_call.1} parent=1 // pred_region
      %s48 = ssub.s32 1024, 1024
      %49 = vsyncadd [#allocation5], %s48
      %s50 = sshll.u32 [#allocation6], 4
      %s51 = int_to_ptr.vmem [resolvable:$true] %s50
      %56 = dma.hbm_to_vmem [thread:$0]  %s4, 1024, %s51, [#allocation5], 64, 64, 4
    $region21: #{tpu_custom_call.1} parent=1 // pred_fallthru
      _
    // Predicated region
    $region22: #{tpu_custom_call.1} parent=1 // pred_check
      _
    $region23: #{tpu_custom_call.1} parent=1 // pred_check_branch
      %58 = sbr.rel (0) target = $region25
    $region24: #{tpu_custom_call.1} parent=1 // pred_region
      %s60 = ssub.s32 2048, 2048
      %61 = vsyncadd [#allocation8], %s60
      %s62 = sshll.u32 [#allocation7], 4
      %s63 = int_to_ptr.vmem [resolvable:$true] %s62
      %68 = dma.hbm_to_vmem [thread:$0]  %s5, 2048, %s63, [#allocation8], 128, 128, 8
    $region25: #{tpu_custom_call.1} parent=1 // pred_fallthru
      _
    // Predicated region
    $region26: #{tpu_custom_call.1} parent=1 // pred_check
      _
    $region27: #{tpu_custom_call.1} parent=1 // pred_check_branch
      %70 = sbr.rel (0) target = $region29
    $region28: #{tpu_custom_call.1} parent=1 // pred_region
      _
    $region29: #{tpu_custom_call.1} parent=1 // pred_fallthru
      _
    // Predicated region
    $region30: #{tpu_custom_call.1} parent=1 // pred_check
      _
    $region31: #{tpu_custom_call.1} parent=1 // pred_check_branch
      %72 = sbr.rel (0) target = $region33
    $region32: #{tpu_custom_call.1} parent=1 // pred_region
      %s74 = ssub.s32 2048, 2048
      %75 = vsyncadd [#allocation8], %s74
      %s76 = sshll.u32 [#allocation9], 4
      %s77 = int_to_ptr.vmem [resolvable:$true] %s76
      %82 = dma.hbm_to_vmem [thread:$0]  %s7, 2048, %s77, [#allocation8], 64, 64, 4
    $region33: #{tpu_custom_call.1} parent=1 // pred_fallthru
      _
    // Predicated region
    $region34: #{tpu_custom_call.1} parent=1 // pred_check
      _
    $region35: #{tpu_custom_call.1} parent=1 // pred_check_branch
      %84 = sbr.rel (0) target = $region37
    $region36: #{tpu_custom_call.1} parent=1 // pred_region
      _
    $region37: #{tpu_custom_call.1} parent=1 // pred_fallthru
      _
    // Predicated region
    $region38: #{tpu_custom_call.1} parent=1 // pred_check
      _
    $region39: #{tpu_custom_call.1} parent=1 // pred_check_branch
      %86 = sbr.rel (0) target = $region41
    $region40: #{tpu_custom_call.1} parent=1 // pred_region
      %87 = dma.done [#allocation3], 896
    $region41: #{tpu_custom_call.1} parent=1 // pred_fallthru
      _
    // Predicated region
    $region42: #{tpu_custom_call.1} parent=1 // pred_check
      _
    $region43: #{tpu_custom_call.1} parent=1 // pred_check_branch
      %89 = sbr.rel (0) target = $region45
    $region44: #{tpu_custom_call.1} parent=1 // pred_region
      %90 = dma.done [#allocation5], 3072
    $region45: #{tpu_custom_call.1} parent=1 // pred_fallthru
      _
    // Predicated region
    $region46: #{tpu_custom_call.1} parent=1 // pred_check
      _
    $region47: #{tpu_custom_call.1} parent=1 // pred_check_branch
      %92 = sbr.rel (0) target = $region49
    $region48: #{tpu_custom_call.1} parent=1 // pred_region
      %93 = dma.done [#allocation5], 1024
    $region49: #{tpu_custom_call.1} parent=1 // pred_fallthru
      _
    // Predicated region
    $region50: #{tpu_custom_call.1} parent=1 // pred_check
      _
    $region51: #{tpu_custom_call.1} parent=1 // pred_check_branch
      %95 = sbr.rel (0) target = $region53
    $region52: #{tpu_custom_call.1} parent=1 // pred_region
      %96 = dma.done [#allocation8], 2048
    $region53: #{tpu_custom_call.1} parent=1 // pred_fallthru
      _
    // Predicated region
    $region54: #{tpu_custom_call.1} parent=1 // pred_check
      _
    $region55: #{tpu_custom_call.1} parent=1 // pred_check_branch
      %98 = sbr.rel (0) target = $region57
    $region56: #{tpu_custom_call.1} parent=1 // pred_region
      %99 = dma.done [#allocation8], 2048
    $region57: #{tpu_custom_call.1} parent=1 // pred_fallthru
      _
    %v101 = vld [vmem:[%s0] sm:$0xff]
    %v102 = vld [vmem:[%s0 + $0x8] sm:$0xff]
    %v103 = vld [vmem:[%s0 + $0x10] sm:$0xff]
    %v104 = vld [vmem:[%s0 + $0x18] sm:$0xff]
    %v105 = vlaneseq
    %v106 = vand.u32 %v105, 127
    %107 = vset.pattern.permute.xlu0 0
    %108 = vperm.xlu0 %107, %v101
    %v109 = vpop.permute.xlu0 %108
    %110 = vset.pattern.permute.xlu0 0
    %111 = vperm.xlu0 %110, %v102
    %v112 = vpop.permute.xlu0 %111
    %113 = vset.pattern.permute.xlu0 0
    %114 = vperm.xlu0 %113, %v103
    %v115 = vpop.permute.xlu0 %114
    %116 = vset.pattern.permute.xlu0 0
    %117 = vperm.xlu0 %116, %v104
    %v118 = vpop.permute.xlu0 %117
    %vm119 = vcmp.eq.s32.totalorder %v109, %v106
    %vm120 = vcmp.eq.s32.totalorder %v112, %v106
    %vm121 = vcmp.eq.s32.totalorder %v115, %v106
    %vm122 = vcmp.eq.s32.totalorder %v118, %v106
    %v123 = vsel %vm119, 1, 0
    %v124 = vsel %vm120, 1, 0
    %v125 = vsel %vm121, 1, 0
    %v126 = vsel %vm122, 1, 0
    %v127 = vcvt.s32.f32 %v123
    %v128 = vcvt.s32.f32 %v124
    %v129 = vcvt.s32.f32 %v125
    %v130 = vcvt.s32.f32 %v126
    %v131 = vld [vmem:[#allocation2] sm:$0xff]
    %v132 = vld [vmem:[#allocation2 + $0x8] sm:$0xff]
    %v133 = vld [vmem:[#allocation2 + $0x10] sm:$0xff]
    %v134 = vld [vmem:[#allocation2 + $0x18] sm:$0xff]
    %v135 = vld [vmem:[#allocation2 + $0x20] sm:$0xff]
    %v136 = vld [vmem:[#allocation2 + $0x28] sm:$0xff]
    %v137 = vld [vmem:[#allocation2 + $0x30] sm:$0x3]
    %v138 = vld [vmem:[%s8 + $0x8] sm:$0xff]
    %vm139 = vcmask 408576
    %v141 = vsel %vm139, %v127, 0
    %v144 = vsel %vm139, %v128, 0
    %v147 = vsel %vm139, %v129, 0
    %v150 = vsel %vm139, %v130, 0
    %vm152 = vcmask 1041408
    %v154 = vsel %vm152, %v137, 0
    %156 = vmatprep.subr.mxu0 0.0
    %157 = vmatpush1.msra.mxu0 %v131
    %158 = vmatprep.subr.mxu0 0.0
    %159 = vmatpush1.msra.mxu0 %v132
    %160 = vmatprep.subr.mxu0 0.0
    %161 = vmatpush1.msra.mxu0 %v133
    %162 = vmatprep.subr.mxu0 0.0
    %163 = vmatpush1.msra.mxu0 %v134
    %164 = vmatprep.subr.mxu0 0.0
    %165 = vmatpush1.msra.mxu0 %v135
    %166 = vmatprep.subr.mxu0 0.0
    %167 = vmatpush1.msra.mxu0 %v136
    %168 = vmatprep.subr.mxu0 0.0
    %169 = vmatpush1.msra.mxu0 %v154
    %170 = vmatprep.subr.mxu0 0.0
    %171 = vmatpush1.msra.mxu0 0.0
    %172 = vmatprep.subr.mxu0 0.0
    %173 = vmatpush1.msra.mxu0 0.0
    %174 = vmatprep.subr.mxu0 0.0
    %175 = vmatpush1.msra.mxu0 0.0
    %176 = vmatprep.subr.mxu0 0.0
    %177 = vmatpush1.msra.mxu0 0.0
    %178 = vmatprep.subr.mxu0 0.0
    %179 = vmatpush1.msra.mxu0 0.0
    %180 = vmatprep.subr.mxu0 0.0
    %181 = vmatpush1.msra.mxu0 0.0
    %182 = vmatprep.subr.mxu0 0.0
    %183 = vmatpush1.msra.mxu0 0.0
    %184 = vmatprep.subr.mxu0 0.0
    %185 = vmatpush1.msra.mxu0 0.0
    %186 = vmatprep.subr.mxu0 0.0
    %187 = vmatpush1.msra.mxu0 0.0
    %188 = vmatprep.subr.mxu0 0.0
    %189 = vmatpush1.msra.mxu0 0.0
    %190 = vmatprep.subr.mxu0 0.0
    %191 = vmatpush1.msra.mxu0 0.0
    %192 = vmatprep.subr.mxu0 0.0
    %193 = vmatpush1.msra.mxu0 0.0
    %194 = vmatprep.subr.mxu0 0.0
    %195 = vmatpush1.msra.mxu0 0.0
    %196 = vmatprep.subr.mxu0 0.0
    %197 = vmatpush1.msra.mxu0 0.0
    %198 = vmatprep.subr.mxu0 0.0
    %199 = vmatpush1.msra.mxu0 0.0
    %200 = vmatprep.subr.mxu0 0.0
    %201 = vmatpush1.msra.mxu0 0.0
    %202 = vmatprep.subr.mxu0 0.0
    %203 = vmatpush1.msra.mxu0 0.0
    %204 = vmatprep.subr.mxu0 0.0
    %205 = vmatpush1.msra.mxu0 0.0
    %206 = vmatprep.subr.mxu0 0.0
    %207 = vmatpush1.msra.mxu0 0.0
    %208 = vmatprep.subr.mxu0 0.0
    %209 = vmatpush1.msra.mxu0 0.0
    %210 = vmatprep.subr.mxu0 0.0
    %211 = vmatpush1.msra.mxu0 0.0
    %212 = vmatprep.subr.mxu0 0.0
    %213 = vmatpush1.msra.mxu0 0.0
    %214 = vmatprep.subr.mxu0 0.0
    %215 = vmatpush1.msra.mxu0 0.0
    %216 = vmatprep.subr.mxu0 0.0
    %217 = vmatpush1.msra.mxu0 0.0
    %218 = vmatprep.subr.mxu0 0.0
    %219 = vmatpush1.msra.mxu0 0.0
    %220 = vmatprep.mubr.f32.mxu0 0.0
    %221 = vmatmul.mubr.f32.gmra.mrb[0].mxu0 %v141
    %v222 = vpop.f32.mrb[0].mxu0
    %v223 = vadd.f32 %v138, %v222
    %v224 = vpop.f32.mrb[0].mxu0
    %225 = vmatprep.mubr.f32.mxu0 0.0
    %226 = vmatmul.mubr.f32.gmra.mrb[0].mxu0 %v144
    %v227 = vpop.f32.mrb[0].mxu0
    %v228 = vadd.f32 %v138, %v227
    %v229 = vpop.f32.mrb[0].mxu0
    %230 = vmatprep.mubr.f32.mxu0 0.0
    %231 = vmatmul.mubr.f32.gmra.mrb[0].mxu0 %v147
    %v232 = vpop.f32.mrb[0].mxu0
    %v233 = vadd.f32 %v138, %v232
    %v234 = vpop.f32.mrb[0].mxu0
    %235 = vmatprep.mubr.f32.mxu0 0.0
    %236 = vmatmul.mubr.f32.gmra.mrb[0].mxu0 %v150
    %v237 = vpop.f32.mrb[0].mxu0
    %v238 = vadd.f32 %v138, %v237
    %v239 = vpop.f32.mrb[0].mxu0
    %240 = vdwg.mxu0
    %v241 = vpack.c.bf16 %v228, %v223
    %v242 = vpack.c.bf16 %v238, %v233
    %v243 = vld [vmem:[#allocation4] sm:$0xff]
    %v244 = vld [vmem:[#allocation4 + $0x8] sm:$0xf]
    %v245 = vld [vmem:[#allocation4 + $0xc] sm:$0xff]
    %v246 = vld [vmem:[#allocation4 + $0x14] sm:$0xf]
    %v247 = vld [vmem:[#allocation4 + $0x18] sm:$0xff]
    %v248 = vld [vmem:[#allocation4 + $0x20] sm:$0xf]
    %v249 = vld [vmem:[#allocation4 + $0x24] sm:$0xff]
    %v250 = vld [vmem:[#allocation4 + $0x2c] sm:$0xf]
    %v251 = vld [vmem:[#allocation4 + $0x30] sm:$0xff]
    %v252 = vld [vmem:[#allocation4 + $0x38] sm:$0xf]
    %v253 = vld [vmem:[#allocation4 + $0x3c] sm:$0xff]
    %v254 = vld [vmem:[#allocation4 + $0x44] sm:$0xf]
    %v255 = vld [vmem:[#allocation4 + $0x48] sm:$0xff]
    %v256 = vld [vmem:[#allocation4 + $0x50] sm:$0xf]
    %v257 = vld [vmem:[#allocation4 + $0x54] sm:$0xff]
    %v258 = vld [vmem:[#allocation4 + $0x5c] sm:$0xf]
    %v259 = vld [vmem:[#allocation4 + $0x60] sm:$0xff]
    %v260 = vld [vmem:[#allocation4 + $0x68] sm:$0xf]
    %v261 = vld [vmem:[#allocation4 + $0x6c] sm:$0xff]
    %v262 = vld [vmem:[#allocation4 + $0x74] sm:$0xf]
    %v263 = vld [vmem:[#allocation4 + $0x78] sm:$0xff]
    %v264 = vld [vmem:[#allocation4 + $0x80] sm:$0xf]
    %v265 = vld [vmem:[#allocation4 + $0x84] sm:$0xff]
    %v266 = vld [vmem:[#allocation4 + $0x8c] sm:$0xf]
    %v267 = vld [vmem:[#allocation4 + $0x90] sm:$0xff]
    %v268 = vld [vmem:[#allocation4 + $0x98] sm:$0xf]
    %v269 = vld [vmem:[#allocation4 + $0x9c] sm:$0xff]
    %v270 = vld [vmem:[#allocation4 + $0xa4] sm:$0xf]
    %v271 = vld [vmem:[#allocation4 + $0xa8] sm:$0xff]
    %v272 = vld [vmem:[#allocation4 + $0xb0] sm:$0xf]
    %v273 = vld [vmem:[#allocation4 + $0xb4] sm:$0xff]
    %v274 = vld [vmem:[#allocation4 + $0xbc] sm:$0xf]
    %v275 = vld [vmem:[%s3] sm:$0x7]
    %v277 = vlaneseq
    %v278 = vshrl.u32 %v277, 7
    %v279 = vsub.s32 0, %v278
    %v280 = vrot.slane %v275, %v279
    %v281 = vlaneseq
    %v282 = vshrl.u32 %v281, 7
    %v283 = vsub.s32 1, %v282
    %v284 = vrot.slane %v275, %v283
    %v285 = vlaneseq
    %v286 = vshrl.u32 %v285, 7
    %v287 = vsub.s32 2, %v286
    %v288 = vrot.slane %v275, %v287
    %v324 = vunpack.c.l.b16 %v243
    %v325 = vunpack.c.h.b16 %v243
    %v326 = vunpack.c.l.b16 %v244
    %v327 = vunpack.c.l.b16 %v245
    %v328 = vunpack.c.h.b16 %v245
    %v329 = vunpack.c.l.b16 %v246
    %v330 = vunpack.c.l.b16 %v247
    %v331 = vunpack.c.h.b16 %v247
    %v332 = vunpack.c.l.b16 %v248
    %v333 = vunpack.c.l.b16 %v249
    %v334 = vunpack.c.h.b16 %v249
    %v335 = vunpack.c.l.b16 %v250
    %v336 = vunpack.c.l.b16 %v251
    %v337 = vunpack.c.h.b16 %v251
    %v338 = vunpack.c.l.b16 %v252
    %v339 = vunpack.c.l.b16 %v253
    %v340 = vunpack.c.h.b16 %v253
    %v341 = vunpack.c.l.b16 %v254
    %v342 = vunpack.c.l.b16 %v255
    %v343 = vunpack.c.h.b16 %v255
    %v344 = vunpack.c.l.b16 %v256
    %v345 = vunpack.c.l.b16 %v257
    %v346 = vunpack.c.h.b16 %v257
    %v347 = vunpack.c.l.b16 %v258
    %v348 = vunpack.c.l.b16 %v259
    %v349 = vunpack.c.h.b16 %v259
    %v350 = vunpack.c.l.b16 %v260
    %v351 = vunpack.c.l.b16 %v261
    %v352 = vunpack.c.h.b16 %v261
    %v353 = vunpack.c.l.b16 %v262
    %v354 = vunpack.c.l.b16 %v263
    %v355 = vunpack.c.h.b16 %v263
    %v356 = vunpack.c.l.b16 %v264
    %v357 = vunpack.c.l.b16 %v265
    %v358 = vunpack.c.h.b16 %v265
    %v359 = vunpack.c.l.b16 %v266
    %v360 = vunpack.c.l.b16 %v267
    %v361 = vunpack.c.h.b16 %v267
    %v362 = vunpack.c.l.b16 %v268
    %v363 = vunpack.c.l.b16 %v269
    %v364 = vunpack.c.h.b16 %v269
    %v365 = vunpack.c.l.b16 %v270
    %v366 = vunpack.c.l.b16 %v271
    %v367 = vunpack.c.h.b16 %v271
    %v368 = vunpack.c.l.b16 %v272
    %v369 = vunpack.c.l.b16 %v273
    %v370 = vunpack.c.h.b16 %v273
    %v371 = vunpack.c.l.b16 %v274
    %v372 = vpack.c.b16 %v327, %v324
    %v373 = vpack.c.b16 %v328, %v325
    %v374 = vpack.c.b16 %v329, %v326
    %v375 = vpack.c.b16 %v333, %v330
    %v376 = vpack.c.b16 %v334, %v331
    %v377 = vpack.c.b16 %v335, %v332
    %v378 = vpack.c.b16 %v339, %v336
    %v379 = vpack.c.b16 %v340, %v337
    %v380 = vpack.c.b16 %v341, %v338
    %v381 = vpack.c.b16 %v345, %v342
    %v382 = vpack.c.b16 %v346, %v343
    %v383 = vpack.c.b16 %v347, %v344
    %v384 = vpack.c.b16 %v351, %v348
    %v385 = vpack.c.b16 %v352, %v349
    %v386 = vpack.c.b16 %v353, %v350
    %v387 = vpack.c.b16 %v357, %v354
    %v388 = vpack.c.b16 %v358, %v355
    %v389 = vpack.c.b16 %v359, %v356
    %v390 = vpack.c.b16 %v363, %v360
    %v391 = vpack.c.b16 %v364, %v361
    %v392 = vpack.c.b16 %v365, %v362
    %v393 = vpack.c.b16 %v369, %v366
    %v394 = vpack.c.b16 %v370, %v367
    %v395 = vpack.c.b16 %v371, %v368
    %420 = vmatprep.subr.bf16.mxu0 %v373
    %421 = vmatpush1.bf16.msra.mxu0 %v372
    %422 = vmatprep.subr.bf16.mxu0 %v376
    %423 = vmatpush1.bf16.msra.mxu0 %v375
    %424 = vmatprep.subr.bf16.mxu0 %v379
    %425 = vmatpush1.bf16.msra.mxu0 %v378
    %426 = vmatprep.subr.bf16.mxu0 %v382
    %427 = vmatpush1.bf16.msra.mxu0 %v381
    %428 = vmatprep.subr.bf16.mxu0 %v385
    %429 = vmatpush1.bf16.msra.mxu0 %v384
    %430 = vmatprep.subr.bf16.mxu0 %v388
    %431 = vmatpush1.bf16.msra.mxu0 %v387
    %432 = vmatprep.subr.bf16.mxu0 %v391
    %433 = vmatpush1.bf16.msra.mxu0 %v390
    %434 = vmatprep.subr.bf16.mxu0 %v394
    %435 = vmatpush1.bf16.msra.mxu0 %v393
    %436 = vmatprep.subr.bf16.mxu0 0
    %437 = vmatpush1.bf16.msra.mxu0 0
    %438 = vmatprep.subr.bf16.mxu0 0
    %439 = vmatpush1.bf16.msra.mxu0 0
    %440 = vmatprep.subr.bf16.mxu0 0
    %441 = vmatpush1.bf16.msra.mxu0 0
    %442 = vmatprep.subr.bf16.mxu0 0
    %443 = vmatpush1.bf16.msra.mxu0 0
    %444 = vmatprep.subr.bf16.mxu0 0
    %445 = vmatpush1.bf16.msra.mxu0 0
    %446 = vmatprep.subr.bf16.mxu0 0
    %447 = vmatpush1.bf16.msra.mxu0 0
    %448 = vmatprep.subr.bf16.mxu0 0
    %449 = vmatpush1.bf16.msra.mxu0 0
    %450 = vmatprep.subr.bf16.mxu0 0
    %451 = vmatpush1.bf16.msra.mxu0 0
    %452 = vmatprep.mubr.bf16.mxu0 0
    %453 = vmatmul.mubr.bf16.gmra.mrb[0].mxu0 %v241
    %v454 = vpop.f32.mrb[0].mxu0
    %v455 = vadd.f32 %v280, %v454
    %v456 = vpop.f32.mrb[0].mxu0
    %v457 = vadd.f32 %v284, %v456
    %v458 = vpop.f32.mrb[0].mxu0
    %v459 = vadd.f32 %v280, %v458
    %v460 = vpop.f32.mrb[0].mxu0
    %v461 = vadd.f32 %v284, %v460
    %462 = vmatprep.mubr.bf16.mxu0 0
    %463 = vmatmul.mubr.bf16.gmra.mrb[0].mxu0 %v242
    %v464 = vpop.f32.mrb[0].mxu0
    %v465 = vadd.f32 %v280, %v464
    %v466 = vpop.f32.mrb[0].mxu0
    %v467 = vadd.f32 %v284, %v466
    %v468 = vpop.f32.mrb[0].mxu0
    %v469 = vadd.f32 %v280, %v468
    %v470 = vpop.f32.mrb[0].mxu0
    %v471 = vadd.f32 %v284, %v470
    %472 = vdwg.mxu0
    %473 = vmatprep.subr.bf16.mxu0 0
    %474 = vmatpush1.bf16.msra.mxu0 %v374
    %475 = vmatprep.subr.bf16.mxu0 0
    %476 = vmatpush1.bf16.msra.mxu0 %v377
    %477 = vmatprep.subr.bf16.mxu0 0
    %478 = vmatpush1.bf16.msra.mxu0 %v380
    %479 = vmatprep.subr.bf16.mxu0 0
    %480 = vmatpush1.bf16.msra.mxu0 %v383
    %481 = vmatprep.subr.bf16.mxu0 0
    %482 = vmatpush1.bf16.msra.mxu0 %v386
    %483 = vmatprep.subr.bf16.mxu0 0
    %484 = vmatpush1.bf16.msra.mxu0 %v389
    %485 = vmatprep.subr.bf16.mxu0 0
    %486 = vmatpush1.bf16.msra.mxu0 %v392
    %487 = vmatprep.subr.bf16.mxu0 0
    %488 = vmatpush1.bf16.msra.mxu0 %v395
    %489 = vmatprep.subr.bf16.mxu0 0
    %490 = vmatpush1.bf16.msra.mxu0 0
    %491 = vmatprep.subr.bf16.mxu0 0
    %492 = vmatpush1.bf16.msra.mxu0 0
    %493 = vmatprep.subr.bf16.mxu0 0
    %494 = vmatpush1.bf16.msra.mxu0 0
    %495 = vmatprep.subr.bf16.mxu0 0
    %496 = vmatpush1.bf16.msra.mxu0 0
    %497 = vmatprep.subr.bf16.mxu0 0
    %498 = vmatpush1.bf16.msra.mxu0 0
    %499 = vmatprep.subr.bf16.mxu0 0
    %500 = vmatpush1.bf16.msra.mxu0 0
    %501 = vmatprep.subr.bf16.mxu0 0
    %502 = vmatpush1.bf16.msra.mxu0 0
    %503 = vmatprep.subr.bf16.mxu0 0
    %504 = vmatpush1.bf16.msra.mxu0 0
    %505 = vmatprep.mubr.bf16.mxu0 0
    %506 = vmatmul.mubr.bf16.gmra.mrb[0].mxu0 %v241
    %v507 = vpop.f32.mrb[0].mxu0
    %v508 = vadd.f32 %v288, %v507
    %v509 = vpop.f32.mrb[0].mxu0
    %v510 = vpop.f32.mrb[0].mxu0
    %v511 = vadd.f32 %v288, %v510
    %v512 = vpop.f32.mrb[0].mxu0
    %513 = vmatprep.mubr.bf16.mxu0 0
    %514 = vmatmul.mubr.bf16.gmra.mrb[0].mxu0 %v242
    %v515 = vpop.f32.mrb[0].mxu0
    %v516 = vadd.f32 %v288, %v515
    %v517 = vpop.f32.mrb[0].mxu0
    %v518 = vpop.f32.mrb[0].mxu0
    %v519 = vadd.f32 %v288, %v518
    %v520 = vpop.f32.mrb[0].mxu0
    %521 = vdwg.mxu0
    %v522 = vlaneseq
    %v523 = vshrl.u32 %v522, 7
    %v524 = vadd.s32 %v523, 8
    %v525 = vadd.s32 %v523, 16
    %v526 = vadd.s32 %v523, 24
    %v527 = vmul.u32 %v106, 8
    %vm528 = vcmp.ge.s32.totalorder %v523, %v527
    %vm529 = vcmp.ge.s32.totalorder %v524, %v527
    %vm530 = vcmp.ge.s32.totalorder %v525, %v527
    %vm531 = vcmp.ge.s32.totalorder %v526, %v527
    %v532 = vadd.s32 %v106, 1
    %v533 = vmul.u32 %v532, 8
    %vm534 = vcmp.lt.s32.totalorder %v523, %v533
    %vm535 = vcmp.lt.s32.totalorder %v524, %v533
    %vm536 = vcmp.lt.s32.totalorder %v525, %v533
    %vm537 = vcmp.lt.s32.totalorder %v526, %v533
    %vm538 = vmand %vm528, %vm534
    %vm539 = vmand %vm529, %vm535
    %vm540 = vmand %vm530, %vm536
    %vm541 = vmand %vm531, %vm537
    %v542 = vsel %vm538, 1, 0
    %v543 = vsel %vm539, 1, 0
    %v544 = vsel %vm540, 1, 0
    %v545 = vsel %vm541, 1, 0
    %v546 = vcvt.s32.f32 %v542
    %v547 = vcvt.s32.f32 %v543
    %v548 = vcvt.s32.f32 %v544
    %v549 = vcvt.s32.f32 %v545
    %vm550 = vcmask 31744
    %v552 = vsel %vm550, %v546, 0
    %v555 = vsel %vm550, %v547, 0
    %v558 = vsel %vm550, %v548, 0
    %v561 = vsel %vm550, %v549, 0
    %563 = vmatprep.subr.mxu0 0.0
    %564 = vmatpush1.xpose.msra.mxu0 %v552
    %565 = vmatprep.subr.mxu0 0.0
    %566 = vmatpush1.xpose.msra.mxu0 %v555
    %567 = vmatprep.subr.mxu0 0.0
    %568 = vmatpush1.xpose.msra.mxu0 %v558
    %569 = vmatprep.subr.mxu0 0.0
    %570 = vmatpush1.xpose.msra.mxu0 %v561
    %571 = vmatprep.subr.mxu0 0.0
    %572 = vmatpush1.xpose.msra.mxu0 0.0
    %573 = vmatprep.subr.mxu0 0.0
    %574 = vmatpush1.xpose.msra.mxu0 0.0
    %575 = vmatprep.subr.mxu0 0.0
    %576 = vmatpush1.xpose.msra.mxu0 0.0
    %577 = vmatprep.subr.mxu0 0.0
    %578 = vmatpush1.xpose.msra.mxu0 0.0
    %579 = vmatprep.subr.mxu0 0.0
    %580 = vmatpush1.xpose.msra.mxu0 0.0
    %581 = vmatprep.subr.mxu0 0.0
    %582 = vmatpush1.xpose.msra.mxu0 0.0
    %583 = vmatprep.subr.mxu0 0.0
    %584 = vmatpush1.xpose.msra.mxu0 0.0
    %585 = vmatprep.subr.mxu0 0.0
    %586 = vmatpush1.xpose.msra.mxu0 0.0
    %587 = vmatprep.subr.mxu0 0.0
    %588 = vmatpush1.xpose.msra.mxu0 0.0
    %589 = vmatprep.subr.mxu0 0.0
    %590 = vmatpush1.xpose.msra.mxu0 0.0
    %591 = vmatprep.subr.mxu0 0.0
    %592 = vmatpush1.xpose.msra.mxu0 0.0
    %593 = vmatprep.subr.mxu0 0.0
    %594 = vmatpush1.xpose.msra.mxu0 0.0
    %595 = vmatprep.subr.mxu0 0.0
    %596 = vmatpush1.xpose.msra.mxu0 0.0
    %597 = vmatprep.subr.mxu0 0.0
    %598 = vmatpush1.xpose.msra.mxu0 0.0
    %599 = vmatprep.subr.mxu0 0.0
    %600 = vmatpush1.xpose.msra.mxu0 0.0
    %601 = vmatprep.subr.mxu0 0.0
    %602 = vmatpush1.xpose.msra.mxu0 0.0
    %603 = vmatprep.subr.mxu0 0.0
    %604 = vmatpush1.xpose.msra.mxu0 0.0
    %605 = vmatprep.subr.mxu0 0.0
    %606 = vmatpush1.xpose.msra.mxu0 0.0
    %607 = vmatprep.subr.mxu0 0.0
    %608 = vmatpush1.xpose.msra.mxu0 0.0
    %609 = vmatprep.subr.mxu0 0.0
    %610 = vmatpush1.xpose.msra.mxu0 0.0
    %611 = vmatprep.subr.mxu0 0.0
    %612 = vmatpush1.xpose.msra.mxu0 0.0
    %613 = vmatprep.subr.mxu0 0.0
    %614 = vmatpush1.xpose.msra.mxu0 0.0
    %615 = vmatprep.subr.mxu0 0.0
    %616 = vmatpush1.xpose.msra.mxu0 0.0
    %617 = vmatprep.subr.mxu0 0.0
    %618 = vmatpush1.xpose.msra.mxu0 0.0
    %619 = vmatprep.subr.mxu0 0.0
    %620 = vmatpush1.xpose.msra.mxu0 0.0
    %621 = vmatprep.subr.mxu0 0.0
    %622 = vmatpush1.xpose.msra.mxu0 0.0
    %623 = vmatprep.subr.mxu0 0.0
    %624 = vmatpush1.xpose.msra.mxu0 0.0
    %625 = vmatprep.subr.mxu0 0.0
    %626 = vmatpush1.xpose.msra.mxu0 0.0
    %627 = vmatprep.mubr.f32.mxu0 0.0
    %628 = vmatmul.mubr.f32.gmra.mrb[0].mxu0 %v552
    %v629 = vpop.f32.mrb[0].mxu0
    %v630 = vadd.f32 0.0, %v629
    %v631 = vpop.f32.mrb[0].mxu0
    %632 = vmatprep.mubr.f32.mxu0 0.0
    %633 = vmatmul.mubr.f32.gmra.mrb[0].mxu0 %v555
    %v634 = vpop.f32.mrb[0].mxu0
    %v635 = vadd.f32 0.0, %v634
    %v636 = vpop.f32.mrb[0].mxu0
    %637 = vmatprep.mubr.f32.mxu0 0.0
    %638 = vmatmul.mubr.f32.gmra.mrb[0].mxu0 %v558
    %v639 = vpop.f32.mrb[0].mxu0
    %v640 = vadd.f32 0.0, %v639
    %v641 = vpop.f32.mrb[0].mxu0
    %642 = vmatprep.mubr.f32.mxu0 0.0
    %643 = vmatmul.mubr.f32.gmra.mrb[0].mxu0 %v561
    %v644 = vpop.f32.mrb[0].mxu0
    %v645 = vadd.f32 0.0, %v644
    %v646 = vpop.f32.mrb[0].mxu0
    %647 = vdwg.mxu0
    %v648 = vpack.c.bf16 %v459, %v455
    %v649 = vpack.c.bf16 %v469, %v465
    %652 = vrot.lane.b32.xlu0 %v648, 64
    %v653 = vpop.permute.xlu0 %652
    %654 = vrot.lane.b32.xlu0 %v649, 64
    %v655 = vpop.permute.xlu0 %654
    %vm656 = vcmask 523264
    %v658 = vsel %vm656, %v648, 0
    %v661 = vsel %vm656, %v649, 0
    %v664 = vsel %vm656, %v653, 0
    %v667 = vsel %vm656, %v655, 0
    %669 = vmatprep.subr.bf16.mxu0 0
    %670 = vmatpush1.bf16.xpose.msra.mxu0 %v664
    %671 = vmatprep.subr.bf16.mxu0 0
    %672 = vmatpush1.bf16.xpose.msra.mxu0 %v667
    %673 = vmatprep.subr.bf16.mxu0 0
    %674 = vmatpush1.bf16.xpose.msra.mxu0 0
    %675 = vmatprep.subr.bf16.mxu0 0
    %676 = vmatpush1.bf16.xpose.msra.mxu0 0
    %677 = vmatprep.subr.bf16.mxu0 0
    %678 = vmatpush1.bf16.xpose.msra.mxu0 0
    %679 = vmatprep.subr.bf16.mxu0 0
    %680 = vmatpush1.bf16.xpose.msra.mxu0 0
    %681 = vmatprep.subr.bf16.mxu0 0
    %682 = vmatpush1.bf16.xpose.msra.mxu0 0
    %683 = vmatprep.subr.bf16.mxu0 0
    %684 = vmatpush1.bf16.xpose.msra.mxu0 0
    %685 = vmatprep.subr.bf16.mxu0 0
    %686 = vmatpush1.bf16.xpose.msra.mxu0 0
    %687 = vmatprep.subr.bf16.mxu0 0
    %688 = vmatpush1.bf16.xpose.msra.mxu0 0
    %689 = vmatprep.subr.bf16.mxu0 0
    %690 = vmatpush1.bf16.xpose.msra.mxu0 0
    %691 = vmatprep.subr.bf16.mxu0 0
    %692 = vmatpush1.bf16.xpose.msra.mxu0 0
    %693 = vmatprep.subr.bf16.mxu0 0
    %694 = vmatpush1.bf16.xpose.msra.mxu0 0
    %695 = vmatprep.subr.bf16.mxu0 0
    %696 = vmatpush1.bf16.xpose.msra.mxu0 0
    %697 = vmatprep.subr.bf16.mxu0 0
    %698 = vmatpush1.bf16.xpose.msra.mxu0 0
    %699 = vmatprep.subr.bf16.mxu0 0
    %700 = vmatpush1.bf16.xpose.msra.mxu0 0
    %701 = vmatprep.mubr.bf16.mxu0 0
    %702 = vmatmul.mubr.bf16.gmra.mrb[0].mxu0 %v658
    %v703 = vpop.f32.mrb[0].mxu0
    %v704 = vadd.f32 0.0, %v703
    %v705 = vpop.f32.mrb[0].mxu0
    %v706 = vpop.f32.mrb[0].mxu0
    %v707 = vadd.f32 0.0, %v706
    %v708 = vpop.f32.mrb[0].mxu0
    %709 = vmatprep.mubr.bf16.mxu0 0
    %710 = vmatmul.mubr.bf16.gmra.mrb[0].mxu0 %v661
    %v711 = vpop.f32.mrb[0].mxu0
    %v712 = vadd.f32 0.0, %v711
    %v713 = vpop.f32.mrb[0].mxu0
    %v714 = vpop.f32.mrb[0].mxu0
    %v715 = vadd.f32 0.0, %v714
    %v716 = vpop.f32.mrb[0].mxu0
    %717 = vdwg.mxu0
    %vm718 = vcmp.gt.f32.partialorder %v630, 0.5
    %vm719 = vcmp.gt.f32.partialorder %v635, 0.5
    %vm720 = vcmp.gt.f32.partialorder %v640, 0.5
    %vm721 = vcmp.gt.f32.partialorder %v645, 0.5
    %v722 = vsel %vm718, %v704, -1e+30
    %v723 = vsel %vm719, %v707, -1e+30
    %v724 = vsel %vm720, %v712, -1e+30
    %v725 = vsel %vm721, %v715, -1e+30
    %vm726 = vcmask 261120
    %v727 = vsel %vm726, %v722, -inf
    %728 = vmax.xlane.f32.xlu0 %v727
    %v729 = vpop.xlane.xlu0 %728
    %v730 = vsel %vm726, %v723, -inf
    %731 = vmax.xlane.f32.xlu0 %v730
    %v732 = vpop.xlane.xlu0 %731
    %v733 = vsel %vm726, %v724, -inf
    %734 = vmax.xlane.f32.xlu0 %v733
    %v735 = vpop.xlane.xlu0 %734
    %v736 = vsel %vm726, %v725, -inf
    %737 = vmax.xlane.f32.xlu0 %v736
    %v738 = vpop.xlane.xlu0 %737
    %v739 = vsub.f32 %v722, %v729
    %v740 = vsub.f32 %v723, %v732
    %v741 = vsub.f32 %v724, %v735
    %v742 = vsub.f32 %v725, %v738
    %v743 = vmul.f32 %v739, 1.442695
    %v744 = vpow.pop %v743
    %v745 = vmul.f32 %v740, 1.442695
    %v746 = vpow.pop %v745
    %v747 = vmul.f32 %v741, 1.442695
    %v748 = vpow.pop %v747
    %v749 = vmul.f32 %v742, 1.442695
    %v750 = vpow.pop %v749
    %v751 = vsel %vm726, %v744, 0.0
    %752 = vadd.xlane.f32.xlu0 %v751
    %v753 = vpop.xlane.xlu0 %752
    %v754 = vsel %vm726, %v746, 0.0
    %755 = vadd.xlane.f32.xlu0 %v754
    %v756 = vpop.xlane.xlu0 %755
    %v757 = vsel %vm726, %v748, 0.0
    %758 = vadd.xlane.f32.xlu0 %v757
    %v759 = vpop.xlane.xlu0 %758
    %v760 = vsel %vm726, %v750, 0.0
    %761 = vadd.xlane.f32.xlu0 %v760
    %v762 = vpop.xlane.xlu0 %761
    %v763 = vrcp.pop %v753
    %v764 = vrcp.pop %v756
    %v765 = vrcp.pop %v759
    %v766 = vrcp.pop %v762
    %v767 = vmul.f32 %v744, %v763
    %v768 = vmul.f32 %v746, %v764
    %v769 = vmul.f32 %v748, %v765
    %v770 = vmul.f32 %v750, %v766
    %v771 = vpack.c.bf16 %v768, %v767
    %v772 = vpack.c.bf16 %v770, %v769
    %v773 = vpack.c.bf16 %v461, %v457
    %v774 = vpack.c.bf16 %v471, %v467
    %v776 = vsel %vm726, %v771, 0
    %v779 = vsel %vm726, %v772, 0
    %781 = vmatprep.subr.bf16.mxu0 0
    %782 = vmatpush1.bf16.msra.mxu0 %v773
    %783 = vmatprep.subr.bf16.mxu0 0
    %784 = vmatpush1.bf16.msra.mxu0 %v774
    %785 = vmatprep.subr.bf16.mxu0 0
    %786 = vmatpush1.bf16.msra.mxu0 0
    %787 = vmatprep.subr.bf16.mxu0 0
    %788 = vmatpush1.bf16.msra.mxu0 0
    %789 = vmatprep.subr.bf16.mxu0 0
    %790 = vmatpush1.bf16.msra.mxu0 0
    %791 = vmatprep.subr.bf16.mxu0 0
    %792 = vmatpush1.bf16.msra.mxu0 0
    %793 = vmatprep.subr.bf16.mxu0 0
    %794 = vmatpush1.bf16.msra.mxu0 0
    %795 = vmatprep.subr.bf16.mxu0 0
    %796 = vmatpush1.bf16.msra.mxu0 0
    %797 = vmatprep.subr.bf16.mxu0 0
    %798 = vmatpush1.bf16.msra.mxu0 0
    %799 = vmatprep.subr.bf16.mxu0 0
    %800 = vmatpush1.bf16.msra.mxu0 0
    %801 = vmatprep.subr.bf16.mxu0 0
    %802 = vmatpush1.bf16.msra.mxu0 0
    %803 = vmatprep.subr.bf16.mxu0 0
    %804 = vmatpush1.bf16.msra.mxu0 0
    %805 = vmatprep.subr.bf16.mxu0 0
    %806 = vmatpush1.bf16.msra.mxu0 0
    %807 = vmatprep.subr.bf16.mxu0 0
    %808 = vmatpush1.bf16.msra.mxu0 0
    %809 = vmatprep.subr.bf16.mxu0 0
    %810 = vmatpush1.bf16.msra.mxu0 0
    %811 = vmatprep.subr.bf16.mxu0 0
    %812 = vmatpush1.bf16.msra.mxu0 0
    %813 = vmatprep.mubr.bf16.mxu0 0
    %814 = vmatmul.mubr.bf16.gmra.mrb[0].mxu0 %v776
    %v815 = vpop.f32.mrb[0].mxu0
    %v816 = vadd.f32 0.0, %v815
    %v817 = vpop.f32.mrb[0].mxu0
    %v818 = vpop.f32.mrb[0].mxu0
    %v819 = vadd.f32 0.0, %v818
    %v820 = vpop.f32.mrb[0].mxu0
    %821 = vmatprep.mubr.bf16.mxu0 0
    %822 = vmatmul.mubr.bf16.gmra.mrb[0].mxu0 %v779
    %v823 = vpop.f32.mrb[0].mxu0
    %v824 = vadd.f32 0.0, %v823
    %v825 = vpop.f32.mrb[0].mxu0
    %v826 = vpop.f32.mrb[0].mxu0
    %v827 = vadd.f32 0.0, %v826
    %v828 = vpop.f32.mrb[0].mxu0
    %829 = vdwg.mxu0
    %v830 = vpack.c.bf16 %v511, %v508
    %v831 = vpack.c.bf16 %v519, %v516
    %834 = vrot.lane.b32.xlu0 %v773, 64
    %v835 = vpop.permute.xlu0 %834
    %836 = vrot.lane.b32.xlu0 %v774, 64
    %v837 = vpop.permute.xlu0 %836
    %v839 = vsel %vm656, %v835, 0
    %v842 = vsel %vm656, %v837, 0
    %v845 = vsel %vm656, %v830, 0
    %v848 = vsel %vm656, %v831, 0
    %850 = vmatprep.subr.bf16.mxu0 0
    %851 = vmatpush1.bf16.xpose.msra.mxu0 %v845
    %852 = vmatprep.subr.bf16.mxu0 0
    %853 = vmatpush1.bf16.xpose.msra.mxu0 %v848
    %854 = vmatprep.subr.bf16.mxu0 0
    %855 = vmatpush1.bf16.xpose.msra.mxu0 0
    %856 = vmatprep.subr.bf16.mxu0 0
    %857 = vmatpush1.bf16.xpose.msra.mxu0 0
    %858 = vmatprep.subr.bf16.mxu0 0
    %859 = vmatpush1.bf16.xpose.msra.mxu0 0
    %860 = vmatprep.subr.bf16.mxu0 0
    %861 = vmatpush1.bf16.xpose.msra.mxu0 0
    %862 = vmatprep.subr.bf16.mxu0 0
    %863 = vmatpush1.bf16.xpose.msra.mxu0 0
    %864 = vmatprep.subr.bf16.mxu0 0
    %865 = vmatpush1.bf16.xpose.msra.mxu0 0
    %866 = vmatprep.subr.bf16.mxu0 0
    %867 = vmatpush1.bf16.xpose.msra.mxu0 0
    %868 = vmatprep.subr.bf16.mxu0 0
    %869 = vmatpush1.bf16.xpose.msra.mxu0 0
    %870 = vmatprep.subr.bf16.mxu0 0
    %871 = vmatpush1.bf16.xpose.msra.mxu0 0
    %872 = vmatprep.subr.bf16.mxu0 0
    %873 = vmatpush1.bf16.xpose.msra.mxu0 0
    %874 = vmatprep.subr.bf16.mxu0 0
    %875 = vmatpush1.bf16.xpose.msra.mxu0 0
    %876 = vmatprep.subr.bf16.mxu0 0
    %877 = vmatpush1.bf16.xpose.msra.mxu0 0
    %878 = vmatprep.subr.bf16.mxu0 0
    %879 = vmatpush1.bf16.xpose.msra.mxu0 0
    %880 = vmatprep.subr.bf16.mxu0 0
    %881 = vmatpush1.bf16.xpose.msra.mxu0 0
    %882 = vmatprep.mubr.bf16.mxu0 0
    %883 = vmatmul.mubr.bf16.gmra.mrb[0].mxu0 %v839
    %v884 = vpop.f32.mrb[0].mxu0
    %v885 = vadd.f32 0.0, %v884
    %v886 = vpop.f32.mrb[0].mxu0
    %v887 = vpop.f32.mrb[0].mxu0
    %v888 = vadd.f32 0.0, %v887
    %v889 = vpop.f32.mrb[0].mxu0
    %890 = vmatprep.mubr.bf16.mxu0 0
    %891 = vmatmul.mubr.bf16.gmra.mrb[0].mxu0 %v842
    %v892 = vpop.f32.mrb[0].mxu0
    %v893 = vadd.f32 0.0, %v892
    %v894 = vpop.f32.mrb[0].mxu0
    %v895 = vpop.f32.mrb[0].mxu0
    %v896 = vadd.f32 0.0, %v895
    %v897 = vpop.f32.mrb[0].mxu0
    %898 = vdwg.mxu0
    %v899 = vsel %vm718, %v885, -1e+30
    %v900 = vsel %vm719, %v888, -1e+30
    %v901 = vsel %vm720, %v893, -1e+30
    %v902 = vsel %vm721, %v896, -1e+30
    %v903 = vsel %vm726, %v899, -inf
    %904 = vmax.xlane.f32.xlu0 %v903
    %v905 = vpop.xlane.xlu0 %904
    %v906 = vsel %vm726, %v900, -inf
    %907 = vmax.xlane.f32.xlu0 %v906
    %v908 = vpop.xlane.xlu0 %907
    %v909 = vsel %vm726, %v901, -inf
    %910 = vmax.xlane.f32.xlu0 %v909
    %v911 = vpop.xlane.xlu0 %910
    %v912 = vsel %vm726, %v902, -inf
    %913 = vmax.xlane.f32.xlu0 %v912
    %v914 = vpop.xlane.xlu0 %913
    %v915 = vsub.f32 %v899, %v905
    %v916 = vsub.f32 %v900, %v908
    %v917 = vsub.f32 %v901, %v911
    %v918 = vsub.f32 %v902, %v914
    %v919 = vmul.f32 %v915, 1.442695
    %v920 = vpow.pop %v919
    %v921 = vmul.f32 %v916, 1.442695
    %v922 = vpow.pop %v921
    %v923 = vmul.f32 %v917, 1.442695
    %v924 = vpow.pop %v923
    %v925 = vmul.f32 %v918, 1.442695
    %v926 = vpow.pop %v925
    %v927 = vsel %vm726, %v920, 0.0
    %928 = vadd.xlane.f32.xlu0 %v927
    %v929 = vpop.xlane.xlu0 %928
    %v930 = vsel %vm726, %v922, 0.0
    %931 = vadd.xlane.f32.xlu0 %v930
    %v932 = vpop.xlane.xlu0 %931
    %v933 = vsel %vm726, %v924, 0.0
    %934 = vadd.xlane.f32.xlu0 %v933
    %v935 = vpop.xlane.xlu0 %934
    %v936 = vsel %vm726, %v926, 0.0
    %937 = vadd.xlane.f32.xlu0 %v936
    %v938 = vpop.xlane.xlu0 %937
    %v939 = vrcp.pop %v929
    %v940 = vrcp.pop %v932
    %v941 = vrcp.pop %v935
    %v942 = vrcp.pop %v938
    %v943 = vmul.f32 %v920, %v939
    %v944 = vmul.f32 %v922, %v940
    %v945 = vmul.f32 %v924, %v941
    %v946 = vmul.f32 %v926, %v942
    %v947 = vpack.c.bf16 %v944, %v943
    %v948 = vpack.c.bf16 %v946, %v945
    %951 = vrot.lane.b32.xlu0 %v830, 64
    %v952 = vpop.permute.xlu0 %951
    %953 = vrot.lane.b32.xlu0 %v831, 64
    %v954 = vpop.permute.xlu0 %953
    %v958 = vsel %vm726, %v947, 0
    %v961 = vsel %vm726, %v948, 0
    %963 = vmatprep.subr.bf16.mxu0 0
    %964 = vmatpush1.bf16.msra.mxu0 %v952
    %965 = vmatprep.subr.bf16.mxu0 0
    %966 = vmatpush1.bf16.msra.mxu0 %v954
    %967 = vmatprep.subr.bf16.mxu0 0
    %968 = vmatpush1.bf16.msra.mxu0 0
    %969 = vmatprep.subr.bf16.mxu0 0
    %970 = vmatpush1.bf16.msra.mxu0 0
    %971 = vmatprep.subr.bf16.mxu0 0
    %972 = vmatpush1.bf16.msra.mxu0 0
    %973 = vmatprep.subr.bf16.mxu0 0
    %974 = vmatpush1.bf16.msra.mxu0 0
    %975 = vmatprep.subr.bf16.mxu0 0
    %976 = vmatpush1.bf16.msra.mxu0 0
    %977 = vmatprep.subr.bf16.mxu0 0
    %978 = vmatpush1.bf16.msra.mxu0 0
    %979 = vmatprep.subr.bf16.mxu0 0
    %980 = vmatpush1.bf16.msra.mxu0 0
    %981 = vmatprep.subr.bf16.mxu0 0
    %982 = vmatpush1.bf16.msra.mxu0 0
    %983 = vmatprep.subr.bf16.mxu0 0
    %984 = vmatpush1.bf16.msra.mxu0 0
    %985 = vmatprep.subr.bf16.mxu0 0
    %986 = vmatpush1.bf16.msra.mxu0 0
    %987 = vmatprep.subr.bf16.mxu0 0
    %988 = vmatpush1.bf16.msra.mxu0 0
    %989 = vmatprep.subr.bf16.mxu0 0
    %990 = vmatpush1.bf16.msra.mxu0 0
    %991 = vmatprep.subr.bf16.mxu0 0
    %992 = vmatpush1.bf16.msra.mxu0 0
    %993 = vmatprep.subr.bf16.mxu0 0
    %994 = vmatpush1.bf16.msra.mxu0 0
    %995 = vmatprep.mubr.bf16.mxu0 0
    %996 = vmatmul.mubr.bf16.gmra.mrb[0].mxu0 %v958
    %v997 = vpop.f32.mrb[0].mxu0
    %v998 = vadd.f32 0.0, %v997
    %v999 = vpop.f32.mrb[0].mxu0
    %v1000 = vpop.f32.mrb[0].mxu0
    %v1001 = vadd.f32 0.0, %v1000
    %v1002 = vpop.f32.mrb[0].mxu0
    %1003 = vmatprep.mubr.bf16.mxu0 0
    %1004 = vmatmul.mubr.bf16.gmra.mrb[0].mxu0 %v961
    %v1005 = vpop.f32.mrb[0].mxu0
    %v1006 = vadd.f32 0.0, %v1005
    %v1007 = vpop.f32.mrb[0].mxu0
    %v1008 = vpop.f32.mrb[0].mxu0
    %v1009 = vadd.f32 0.0, %v1008
    %v1010 = vpop.f32.mrb[0].mxu0
    %1011 = vdwg.mxu0
    %v1012 = vpack.c.bf16 %v819, %v816
    %v1013 = vpack.c.bf16 %v827, %v824
    %v1014 = vld [vmem:[#allocation6] sm:$0xf]
    %v1015 = vld [vmem:[#allocation6 + $0x4] sm:$0xf]
    %v1016 = vld [vmem:[#allocation6 + $0x8] sm:$0xf]
    %v1017 = vld [vmem:[#allocation6 + $0xc] sm:$0xf]
    %v1018 = vld [vmem:[#allocation6 + $0x10] sm:$0xf]
    %v1019 = vld [vmem:[#allocation6 + $0x14] sm:$0xf]
    %v1020 = vld [vmem:[#allocation6 + $0x18] sm:$0xf]
    %v1021 = vld [vmem:[#allocation6 + $0x1c] sm:$0xf]
    %v1022 = vpack.c.bf16 %v1001, %v998
    %v1023 = vpack.c.bf16 %v1009, %v1006
    %v1024 = vld [vmem:[#allocation6 + $0x20] sm:$0xf]
    %v1025 = vld [vmem:[#allocation6 + $0x24] sm:$0xf]
    %v1026 = vld [vmem:[#allocation6 + $0x28] sm:$0xf]
    %v1027 = vld [vmem:[#allocation6 + $0x2c] sm:$0xf]
    %v1028 = vld [vmem:[#allocation6 + $0x30] sm:$0xf]
    %v1029 = vld [vmem:[#allocation6 + $0x34] sm:$0xf]
    %v1030 = vld [vmem:[#allocation6 + $0x38] sm:$0xf]
    %v1031 = vld [vmem:[#allocation6 + $0x3c] sm:$0xf]
    %v1040 = vunpack.c.l.b16 %v1024
    %v1041 = vunpack.c.l.b16 %v1025
    %v1042 = vunpack.c.l.b16 %v1026
    %v1043 = vunpack.c.l.b16 %v1027
    %v1044 = vunpack.c.l.b16 %v1028
    %v1045 = vunpack.c.l.b16 %v1029
    %v1046 = vunpack.c.l.b16 %v1030
    %v1047 = vunpack.c.l.b16 %v1031
    %v1048 = vpack.c.b16 %v1041, %v1040
    %v1049 = vpack.c.b16 %v1043, %v1042
    %v1050 = vpack.c.b16 %v1045, %v1044
    %v1051 = vpack.c.b16 %v1047, %v1046
    %v1057 = vsel %vm656, %v1022, 0
    %v1060 = vsel %vm656, %v1023, 0
    %1062 = vmatprep.subr.bf16.mxu0 0
    %1063 = vmatpush1.bf16.msra.mxu0 %v1048
    %1064 = vmatprep.subr.bf16.mxu0 0
    %1065 = vmatpush1.bf16.msra.mxu0 %v1049
    %1066 = vmatprep.subr.bf16.mxu0 0
    %1067 = vmatpush1.bf16.msra.mxu0 %v1050
    %1068 = vmatprep.subr.bf16.mxu0 0
    %1069 = vmatpush1.bf16.msra.mxu0 %v1051
    %1070 = vmatprep.subr.bf16.mxu0 0
    %1071 = vmatpush1.bf16.msra.mxu0 0
    %1072 = vmatprep.subr.bf16.mxu0 0
    %1073 = vmatpush1.bf16.msra.mxu0 0
    %1074 = vmatprep.subr.bf16.mxu0 0
    %1075 = vmatpush1.bf16.msra.mxu0 0
    %1076 = vmatprep.subr.bf16.mxu0 0
    %1077 = vmatpush1.bf16.msra.mxu0 0
    %1078 = vmatprep.subr.bf16.mxu0 0
    %1079 = vmatpush1.bf16.msra.mxu0 0
    %1080 = vmatprep.subr.bf16.mxu0 0
    %1081 = vmatpush1.bf16.msra.mxu0 0
    %1082 = vmatprep.subr.bf16.mxu0 0
    %1083 = vmatpush1.bf16.msra.mxu0 0
    %1084 = vmatprep.subr.bf16.mxu0 0
    %1085 = vmatpush1.bf16.msra.mxu0 0
    %1086 = vmatprep.subr.bf16.mxu0 0
    %1087 = vmatpush1.bf16.msra.mxu0 0
    %1088 = vmatprep.subr.bf16.mxu0 0
    %1089 = vmatpush1.bf16.msra.mxu0 0
    %1090 = vmatprep.subr.bf16.mxu0 0
    %1091 = vmatpush1.bf16.msra.mxu0 0
    %1092 = vmatprep.subr.bf16.mxu0 0
    %1093 = vmatpush1.bf16.msra.mxu0 0
    %1094 = vmatprep.mubr.bf16.mxu0 0
    %1095 = vmatmul.mubr.bf16.gmra.mrb[0].mxu0 %v1057
    %v1096 = vpop.f32.mrb[0].mxu0
    %v1097 = vadd.f32 0.0, %v1096
    %v1098 = vpop.f32.mrb[0].mxu0
    %v1099 = vpop.f32.mrb[0].mxu0
    %v1100 = vadd.f32 0.0, %v1099
    %v1101 = vpop.f32.mrb[0].mxu0
    %1102 = vmatprep.mubr.bf16.mxu0 0
    %1103 = vmatmul.mubr.bf16.gmra.mrb[0].mxu0 %v1060
    %v1104 = vpop.f32.mrb[0].mxu0
    %v1105 = vadd.f32 0.0, %v1104
    %v1106 = vpop.f32.mrb[0].mxu0
    %v1107 = vpop.f32.mrb[0].mxu0
    %v1108 = vadd.f32 0.0, %v1107
    %v1109 = vpop.f32.mrb[0].mxu0
    %1110 = vdwg.mxu0
    %v1119 = vunpack.c.l.b16 %v1014
    %v1120 = vunpack.c.l.b16 %v1015
    %v1121 = vunpack.c.l.b16 %v1016
    %v1122 = vunpack.c.l.b16 %v1017
    %v1123 = vunpack.c.l.b16 %v1018
    %v1124 = vunpack.c.l.b16 %v1019
    %v1125 = vunpack.c.l.b16 %v1020
    %v1126 = vunpack.c.l.b16 %v1021
    %v1127 = vpack.c.b16 %v1120, %v1119
    %v1128 = vpack.c.b16 %v1122, %v1121
    %v1129 = vpack.c.b16 %v1124, %v1123
    %v1130 = vpack.c.b16 %v1126, %v1125
    %v1136 = vsel %vm656, %v1012, 0
    %v1139 = vsel %vm656, %v1013, 0
    %1141 = vmatprep.subr.bf16.mxu0 0
    %1142 = vmatpush1.bf16.msra.mxu0 %v1127
    %1143 = vmatprep.subr.bf16.mxu0 0
    %1144 = vmatpush1.bf16.msra.mxu0 %v1128
    %1145 = vmatprep.subr.bf16.mxu0 0
    %1146 = vmatpush1.bf16.msra.mxu0 %v1129
    %1147 = vmatprep.subr.bf16.mxu0 0
    %1148 = vmatpush1.bf16.msra.mxu0 %v1130
    %1149 = vmatprep.subr.bf16.mxu0 0
    %1150 = vmatpush1.bf16.msra.mxu0 0
    %1151 = vmatprep.subr.bf16.mxu0 0
    %1152 = vmatpush1.bf16.msra.mxu0 0
    %1153 = vmatprep.subr.bf16.mxu0 0
    %1154 = vmatpush1.bf16.msra.mxu0 0
    %1155 = vmatprep.subr.bf16.mxu0 0
    %1156 = vmatpush1.bf16.msra.mxu0 0
    %1157 = vmatprep.subr.bf16.mxu0 0
    %1158 = vmatpush1.bf16.msra.mxu0 0
    %1159 = vmatprep.subr.bf16.mxu0 0
    %1160 = vmatpush1.bf16.msra.mxu0 0
    %1161 = vmatprep.subr.bf16.mxu0 0
    %1162 = vmatpush1.bf16.msra.mxu0 0
    %1163 = vmatprep.subr.bf16.mxu0 0
    %1164 = vmatpush1.bf16.msra.mxu0 0
    %1165 = vmatprep.subr.bf16.mxu0 0
    %1166 = vmatpush1.bf16.msra.mxu0 0
    %1167 = vmatprep.subr.bf16.mxu0 0
    %1168 = vmatpush1.bf16.msra.mxu0 0
    %1169 = vmatprep.subr.bf16.mxu0 0
    %1170 = vmatpush1.bf16.msra.mxu0 0
    %1171 = vmatprep.subr.bf16.mxu0 0
    %1172 = vmatpush1.bf16.msra.mxu0 0
    %1173 = vmatprep.mubr.bf16.mxu0 0
    %1174 = vmatmul.mubr.bf16.gmra.mrb[0].mxu0 %v1136
    %v1175 = vpop.f32.mrb[0].mxu0
    %v1176 = vadd.f32 %v1097, %v1175
    %v1177 = vpop.f32.mrb[0].mxu0
    %v1178 = vpop.f32.mrb[0].mxu0
    %v1179 = vadd.f32 %v1100, %v1178
    %v1180 = vpop.f32.mrb[0].mxu0
    %1181 = vmatprep.mubr.bf16.mxu0 0
    %1182 = vmatmul.mubr.bf16.gmra.mrb[0].mxu0 %v1139
    %v1183 = vpop.f32.mrb[0].mxu0
    %v1184 = vadd.f32 %v1105, %v1183
    %v1185 = vpop.f32.mrb[0].mxu0
    %v1186 = vpop.f32.mrb[0].mxu0
    %v1187 = vadd.f32 %v1108, %v1186
    %v1188 = vpop.f32.mrb[0].mxu0
    %1189 = vdwg.mxu0
    %v1190 = vld [vmem:[%s8] sm:$0x1]
    %v1191 = vlaneseq
    %v1192 = vshrl.u32 %v1191, 7
    %v1193 = vsub.s32 0, %v1192
    %v1194 = vrot.slane %v1190, %v1193
    %v1195 = vadd.f32 %v1176, %v1194
    %v1196 = vadd.f32 %v1179, %v1194
    %v1197 = vadd.f32 %v1184, %v1194
    %v1198 = vadd.f32 %v1187, %v1194
    %v1199 = vadd.f32 %v223, %v1195
    %v1200 = vadd.f32 %v228, %v1196
    %v1201 = vadd.f32 %v233, %v1197
    %v1202 = vadd.f32 %v238, %v1198
    %v1203 = vld [vmem:[%s8 + $0x1] sm:$0x1]
    %v1204 = vld [vmem:[%s8 + $0x2] sm:$0x1]
    %1205 = vadd.xlane.f32.xlu0 %v1199
    %v1206 = vpop.xlane.xlu0 %1205
    %1207 = vadd.xlane.f32.xlu0 %v1200
    %v1208 = vpop.xlane.xlu0 %1207
    %1209 = vadd.xlane.f32.xlu0 %v1201
    %v1210 = vpop.xlane.xlu0 %1209
    %1211 = vadd.xlane.f32.xlu0 %v1202
    %v1212 = vpop.xlane.xlu0 %1211
    %v1213 = vrcp.pop 128.0
    %v1214 = vmul.f32 %v1206, %v1213
    %v1215 = vmul.f32 %v1208, %v1213
    %v1216 = vmul.f32 %v1210, %v1213
    %v1217 = vmul.f32 %v1212, %v1213
    %v1218 = vsub.f32 %v1199, %v1214
    %v1219 = vsub.f32 %v1200, %v1215
    %v1220 = vsub.f32 %v1201, %v1216
    %v1221 = vsub.f32 %v1202, %v1217
    %v1222 = vmul.f32 %v1218, %v1218
    %v1223 = vmul.f32 %v1219, %v1219
    %v1224 = vmul.f32 %v1220, %v1220
    %v1225 = vmul.f32 %v1221, %v1221
    %1226 = vadd.xlane.f32.xlu0 %v1222
    %v1227 = vpop.xlane.xlu0 %1226
    %1228 = vadd.xlane.f32.xlu0 %v1223
    %v1229 = vpop.xlane.xlu0 %1228
    %1230 = vadd.xlane.f32.xlu0 %v1224
    %v1231 = vpop.xlane.xlu0 %1230
    %1232 = vadd.xlane.f32.xlu0 %v1225
    %v1233 = vpop.xlane.xlu0 %1232
    %v1234 = vmul.f32 %v1227, %v1213
    %v1235 = vmul.f32 %v1229, %v1213
    %v1236 = vmul.f32 %v1231, %v1213
    %v1237 = vmul.f32 %v1233, %v1213
    %v1238 = vadd.f32 %v1234, 1e-05
    %v1239 = vadd.f32 %v1235, 1e-05
    %v1240 = vadd.f32 %v1236, 1e-05
    %v1241 = vadd.f32 %v1237, 1e-05
    %v1242 = vrsqrt.pop %v1238
    %v1243 = vrsqrt.pop %v1239
    %v1244 = vrsqrt.pop %v1240
    %v1245 = vrsqrt.pop %v1241
    %v1246 = vmul.f32 %v1218, %v1242
    %v1247 = vmul.f32 %v1219, %v1243
    %v1248 = vmul.f32 %v1220, %v1244
    %v1249 = vmul.f32 %v1221, %v1245
    %v1250 = vlaneseq
    %v1251 = vshrl.u32 %v1250, 7
    %v1252 = vsub.s32 0, %v1251
    %v1253 = vrot.slane %v1203, %v1252
    %v1254 = vmul.f32 %v1246, %v1253
    %v1255 = vmul.f32 %v1247, %v1253
    %v1256 = vmul.f32 %v1248, %v1253
    %v1257 = vmul.f32 %v1249, %v1253
    %v1258 = vlaneseq
    %v1259 = vshrl.u32 %v1258, 7
    %v1260 = vsub.s32 0, %v1259
    %v1261 = vrot.slane %v1204, %v1260
    %v1262 = vadd.f32 %v1254, %v1261
    %v1263 = vadd.f32 %v1255, %v1261
    %v1264 = vadd.f32 %v1256, %v1261
    %v1265 = vadd.f32 %v1257, %v1261
    %v1266 = vpack.c.bf16 %v1263, %v1262
    %v1267 = vpack.c.bf16 %v1265, %v1264
    %v1268 = vld [vmem:[#allocation7] sm:$0xff]
    %v1269 = vld [vmem:[#allocation7 + $0x8] sm:$0xff]
    %v1270 = vld [vmem:[#allocation7 + $0x10] sm:$0xff]
    %v1271 = vld [vmem:[#allocation7 + $0x18] sm:$0xff]
    %v1272 = vld [vmem:[#allocation7 + $0x20] sm:$0xff]
    %v1273 = vld [vmem:[#allocation7 + $0x28] sm:$0xff]
    %v1274 = vld [vmem:[#allocation7 + $0x30] sm:$0xff]
    %v1275 = vld [vmem:[#allocation7 + $0x38] sm:$0xff]
    %v1276 = vld [vmem:[#allocation7 + $0x40] sm:$0xff]
    %v1277 = vld [vmem:[#allocation7 + $0x48] sm:$0xff]
    %v1278 = vld [vmem:[#allocation7 + $0x50] sm:$0xff]
    %v1279 = vld [vmem:[#allocation7 + $0x58] sm:$0xff]
    %v1280 = vld [vmem:[#allocation7 + $0x60] sm:$0xff]
    %v1281 = vld [vmem:[#allocation7 + $0x68] sm:$0xff]
    %v1282 = vld [vmem:[#allocation7 + $0x70] sm:$0xff]
    %v1283 = vld [vmem:[#allocation7 + $0x78] sm:$0xff]
    %v1284 = vld [vmem:[%s6] sm:$0x3]
    %v1286 = vlaneseq
    %v1287 = vshrl.u32 %v1286, 7
    %v1288 = vsub.s32 0, %v1287
    %v1289 = vrot.slane %v1284, %v1288
    %v1290 = vlaneseq
    %v1291 = vshrl.u32 %v1290, 7
    %v1292 = vsub.s32 1, %v1291
    %v1293 = vrot.slane %v1284, %v1292
    %v1312 = vunpack.c.l.b16 %v1268
    %v1313 = vunpack.c.h.b16 %v1268
    %v1314 = vunpack.c.l.b16 %v1269
    %v1315 = vunpack.c.h.b16 %v1269
    %v1316 = vunpack.c.l.b16 %v1270
    %v1317 = vunpack.c.h.b16 %v1270
    %v1318 = vunpack.c.l.b16 %v1271
    %v1319 = vunpack.c.h.b16 %v1271
    %v1320 = vunpack.c.l.b16 %v1272
    %v1321 = vunpack.c.h.b16 %v1272
    %v1322 = vunpack.c.l.b16 %v1273
    %v1323 = vunpack.c.h.b16 %v1273
    %v1324 = vunpack.c.l.b16 %v1274
    %v1325 = vunpack.c.h.b16 %v1274
    %v1326 = vunpack.c.l.b16 %v1275
    %v1327 = vunpack.c.h.b16 %v1275
    %v1328 = vunpack.c.l.b16 %v1276
    %v1329 = vunpack.c.h.b16 %v1276
    %v1330 = vunpack.c.l.b16 %v1277
    %v1331 = vunpack.c.h.b16 %v1277
    %v1332 = vunpack.c.l.b16 %v1278
    %v1333 = vunpack.c.h.b16 %v1278
    %v1334 = vunpack.c.l.b16 %v1279
    %v1335 = vunpack.c.h.b16 %v1279
    %v1336 = vunpack.c.l.b16 %v1280
    %v1337 = vunpack.c.h.b16 %v1280
    %v1338 = vunpack.c.l.b16 %v1281
    %v1339 = vunpack.c.h.b16 %v1281
    %v1340 = vunpack.c.l.b16 %v1282
    %v1341 = vunpack.c.h.b16 %v1282
    %v1342 = vunpack.c.l.b16 %v1283
    %v1343 = vunpack.c.h.b16 %v1283
    %v1344 = vpack.c.b16 %v1314, %v1312
    %v1345 = vpack.c.b16 %v1315, %v1313
    %v1346 = vpack.c.b16 %v1318, %v1316
    %v1347 = vpack.c.b16 %v1319, %v1317
    %v1348 = vpack.c.b16 %v1322, %v1320
    %v1349 = vpack.c.b16 %v1323, %v1321
    %v1350 = vpack.c.b16 %v1326, %v1324
    %v1351 = vpack.c.b16 %v1327, %v1325
    %v1352 = vpack.c.b16 %v1330, %v1328
    %v1353 = vpack.c.b16 %v1331, %v1329
    %v1354 = vpack.c.b16 %v1334, %v1332
    %v1355 = vpack.c.b16 %v1335, %v1333
    %v1356 = vpack.c.b16 %v1338, %v1336
    %v1357 = vpack.c.b16 %v1339, %v1337
    %v1358 = vpack.c.b16 %v1342, %v1340
    %v1359 = vpack.c.b16 %v1343, %v1341
    %1376 = vmatprep.subr.bf16.mxu0 %v1345
    %1377 = vmatpush1.bf16.msra.mxu0 %v1344
    %1378 = vmatprep.subr.bf16.mxu0 %v1347
    %1379 = vmatpush1.bf16.msra.mxu0 %v1346
    %1380 = vmatprep.subr.bf16.mxu0 %v1349
    %1381 = vmatpush1.bf16.msra.mxu0 %v1348
    %1382 = vmatprep.subr.bf16.mxu0 %v1351
    %1383 = vmatpush1.bf16.msra.mxu0 %v1350
    %1384 = vmatprep.subr.bf16.mxu0 %v1353
    %1385 = vmatpush1.bf16.msra.mxu0 %v1352
    %1386 = vmatprep.subr.bf16.mxu0 %v1355
    %1387 = vmatpush1.bf16.msra.mxu0 %v1354
    %1388 = vmatprep.subr.bf16.mxu0 %v1357
    %1389 = vmatpush1.bf16.msra.mxu0 %v1356
    %1390 = vmatprep.subr.bf16.mxu0 %v1359
    %1391 = vmatpush1.bf16.msra.mxu0 %v1358
    %1392 = vmatprep.subr.bf16.mxu0 0
    %1393 = vmatpush1.bf16.msra.mxu0 0
    %1394 = vmatprep.subr.bf16.mxu0 0
    %1395 = vmatpush1.bf16.msra.mxu0 0
    %1396 = vmatprep.subr.bf16.mxu0 0
    %1397 = vmatpush1.bf16.msra.mxu0 0
    %1398 = vmatprep.subr.bf16.mxu0 0
    %1399 = vmatpush1.bf16.msra.mxu0 0
    %1400 = vmatprep.subr.bf16.mxu0 0
    %1401 = vmatpush1.bf16.msra.mxu0 0
    %1402 = vmatprep.subr.bf16.mxu0 0
    %1403 = vmatpush1.bf16.msra.mxu0 0
    %1404 = vmatprep.subr.bf16.mxu0 0
    %1405 = vmatpush1.bf16.msra.mxu0 0
    %1406 = vmatprep.subr.bf16.mxu0 0
    %1407 = vmatpush1.bf16.msra.mxu0 0
    %1408 = vmatprep.mubr.bf16.mxu0 0
    %1409 = vmatmul.mubr.bf16.gmra.mrb[0].mxu0 %v1266
    %v1410 = vpop.f32.mrb[0].mxu0
    %v1411 = vadd.f32 %v1289, %v1410
    %v1412 = vpop.f32.mrb[0].mxu0
    %v1413 = vadd.f32 %v1293, %v1412
    %v1414 = vpop.f32.mrb[0].mxu0
    %v1415 = vadd.f32 %v1289, %v1414
    %v1416 = vpop.f32.mrb[0].mxu0
    %v1417 = vadd.f32 %v1293, %v1416
    %1418 = vmatprep.mubr.bf16.mxu0 0
    %1419 = vmatmul.mubr.bf16.gmra.mrb[0].mxu0 %v1267
    %v1420 = vpop.f32.mrb[0].mxu0
    %v1421 = vadd.f32 %v1289, %v1420
    %v1422 = vpop.f32.mrb[0].mxu0
    %v1423 = vadd.f32 %v1293, %v1422
    %v1424 = vpop.f32.mrb[0].mxu0
    %v1425 = vadd.f32 %v1289, %v1424
    %v1426 = vpop.f32.mrb[0].mxu0
    %v1427 = vadd.f32 %v1293, %v1426
    %1428 = vdwg.mxu0
    %v1429 = vmax.f32 %v1411, 0.0
    %v1430 = vmax.f32 %v1413, 0.0
    %v1431 = vmax.f32 %v1415, 0.0
    %v1432 = vmax.f32 %v1417, 0.0
    %v1433 = vmax.f32 %v1421, 0.0
    %v1434 = vmax.f32 %v1423, 0.0
    %v1435 = vmax.f32 %v1425, 0.0
    %v1436 = vmax.f32 %v1427, 0.0
    %v1437 = vpack.c.bf16 %v1431, %v1429
    %v1438 = vpack.c.bf16 %v1432, %v1430
    %v1439 = vpack.c.bf16 %v1435, %v1433
    %v1440 = vpack.c.bf16 %v1436, %v1434
    %v1441 = vld [vmem:[#allocation9] sm:$0xf]
    %v1442 = vld [vmem:[#allocation9 + $0x4] sm:$0xf]
    %v1443 = vld [vmem:[#allocation9 + $0x8] sm:$0xf]
    %v1444 = vld [vmem:[#allocation9 + $0xc] sm:$0xf]
    %v1445 = vld [vmem:[#allocation9 + $0x10] sm:$0xf]
    %v1446 = vld [vmem:[#allocation9 + $0x14] sm:$0xf]
    %v1447 = vld [vmem:[#allocation9 + $0x18] sm:$0xf]
    %v1448 = vld [vmem:[#allocation9 + $0x1c] sm:$0xf]
    %v1449 = vld [vmem:[#allocation9 + $0x20] sm:$0xf]
    %v1450 = vld [vmem:[#allocation9 + $0x24] sm:$0xf]
    %v1451 = vld [vmem:[#allocation9 + $0x28] sm:$0xf]
    %v1452 = vld [vmem:[#allocation9 + $0x2c] sm:$0xf]
    %v1453 = vld [vmem:[#allocation9 + $0x30] sm:$0xf]
    %v1454 = vld [vmem:[#allocation9 + $0x34] sm:$0xf]
    %v1455 = vld [vmem:[#allocation9 + $0x38] sm:$0xf]
    %v1456 = vld [vmem:[#allocation9 + $0x3c] sm:$0xf]
    %v1457 = vld [vmem:[#allocation9 + $0x40] sm:$0xf]
    %v1458 = vld [vmem:[#allocation9 + $0x44] sm:$0xf]
    %v1459 = vld [vmem:[#allocation9 + $0x48] sm:$0xf]
    %v1460 = vld [vmem:[#allocation9 + $0x4c] sm:$0xf]
    %v1461 = vld [vmem:[#allocation9 + $0x50] sm:$0xf]
    %v1462 = vld [vmem:[#allocation9 + $0x54] sm:$0xf]
    %v1463 = vld [vmem:[#allocation9 + $0x58] sm:$0xf]
    %v1464 = vld [vmem:[#allocation9 + $0x5c] sm:$0xf]
    %v1465 = vld [vmem:[#allocation9 + $0x60] sm:$0xf]
    %v1466 = vld [vmem:[#allocation9 + $0x64] sm:$0xf]
    %v1467 = vld [vmem:[#allocation9 + $0x68] sm:$0xf]
    %v1468 = vld [vmem:[#allocation9 + $0x6c] sm:$0xf]
    %v1469 = vld [vmem:[#allocation9 + $0x70] sm:$0xf]
    %v1470 = vld [vmem:[#allocation9 + $0x74] sm:$0xf]
    %v1471 = vld [vmem:[#allocation9 + $0x78] sm:$0xf]
    %v1472 = vld [vmem:[#allocation9 + $0x7c] sm:$0xf]
    %v1473 = vld [vmem:[%s8 + $0x3] sm:$0x1]
    %v1474 = vlaneseq
    %v1475 = vshrl.u32 %v1474, 7
    %v1476 = vsub.s32 0, %v1475
    %v1477 = vrot.slane %v1473, %v1476
    %v1510 = vunpack.c.l.b16 %v1441
    %v1511 = vunpack.c.l.b16 %v1442
    %v1512 = vunpack.c.l.b16 %v1443
    %v1513 = vunpack.c.l.b16 %v1444
    %v1514 = vunpack.c.l.b16 %v1445
    %v1515 = vunpack.c.l.b16 %v1446
    %v1516 = vunpack.c.l.b16 %v1447
    %v1517 = vunpack.c.l.b16 %v1448
    %v1518 = vunpack.c.l.b16 %v1449
    %v1519 = vunpack.c.l.b16 %v1450
    %v1520 = vunpack.c.l.b16 %v1451
    %v1521 = vunpack.c.l.b16 %v1452
    %v1522 = vunpack.c.l.b16 %v1453
    %v1523 = vunpack.c.l.b16 %v1454
    %v1524 = vunpack.c.l.b16 %v1455
    %v1525 = vunpack.c.l.b16 %v1456
    %v1526 = vunpack.c.l.b16 %v1457
    %v1527 = vunpack.c.l.b16 %v1458
    %v1528 = vunpack.c.l.b16 %v1459
    %v1529 = vunpack.c.l.b16 %v1460
    %v1530 = vunpack.c.l.b16 %v1461
    %v1531 = vunpack.c.l.b16 %v1462
    %v1532 = vunpack.c.l.b16 %v1463
    %v1533 = vunpack.c.l.b16 %v1464
    %v1534 = vunpack.c.l.b16 %v1465
    %v1535 = vunpack.c.l.b16 %v1466
    %v1536 = vunpack.c.l.b16 %v1467
    %v1537 = vunpack.c.l.b16 %v1468
    %v1538 = vunpack.c.l.b16 %v1469
    %v1539 = vunpack.c.l.b16 %v1470
    %v1540 = vunpack.c.l.b16 %v1471
    %v1541 = vunpack.c.l.b16 %v1472
    %v1542 = vpack.c.b16 %v1511, %v1510
    %v1543 = vpack.c.b16 %v1513, %v1512
    %v1544 = vpack.c.b16 %v1515, %v1514
    %v1545 = vpack.c.b16 %v1517, %v1516
    %v1546 = vpack.c.b16 %v1519, %v1518
    %v1547 = vpack.c.b16 %v1521, %v1520
    %v1548 = vpack.c.b16 %v1523, %v1522
    %v1549 = vpack.c.b16 %v1525, %v1524
    %v1550 = vpack.c.b16 %v1527, %v1526
    %v1551 = vpack.c.b16 %v1529, %v1528
    %v1552 = vpack.c.b16 %v1531, %v1530
    %v1553 = vpack.c.b16 %v1533, %v1532
    %v1554 = vpack.c.b16 %v1535, %v1534
    %v1555 = vpack.c.b16 %v1537, %v1536
    %v1556 = vpack.c.b16 %v1539, %v1538
    %v1557 = vpack.c.b16 %v1541, %v1540
    %1574 = vmatprep.subr.bf16.mxu0 0
    %1575 = vmatpush1.bf16.msra.mxu0 %v1542
    %1576 = vmatprep.subr.bf16.mxu0 0
    %1577 = vmatpush1.bf16.msra.mxu0 %v1543
    %1578 = vmatprep.subr.bf16.mxu0 0
    %1579 = vmatpush1.bf16.msra.mxu0 %v1544
    %1580 = vmatprep.subr.bf16.mxu0 0
    %1581 = vmatpush1.bf16.msra.mxu0 %v1545
    %1582 = vmatprep.subr.bf16.mxu0 0
    %1583 = vmatpush1.bf16.msra.mxu0 %v1546
    %1584 = vmatprep.subr.bf16.mxu0 0
    %1585 = vmatpush1.bf16.msra.mxu0 %v1547
    %1586 = vmatprep.subr.bf16.mxu0 0
    %1587 = vmatpush1.bf16.msra.mxu0 %v1548
    %1588 = vmatprep.subr.bf16.mxu0 0
    %1589 = vmatpush1.bf16.msra.mxu0 %v1549
    %1590 = vmatprep.subr.bf16.mxu0 0
    %1591 = vmatpush1.bf16.msra.mxu0 %v1550
    %1592 = vmatprep.subr.bf16.mxu0 0
    %1593 = vmatpush1.bf16.msra.mxu0 %v1551
    %1594 = vmatprep.subr.bf16.mxu0 0
    %1595 = vmatpush1.bf16.msra.mxu0 %v1552
    %1596 = vmatprep.subr.bf16.mxu0 0
    %1597 = vmatpush1.bf16.msra.mxu0 %v1553
    %1598 = vmatprep.subr.bf16.mxu0 0
    %1599 = vmatpush1.bf16.msra.mxu0 %v1554
    %1600 = vmatprep.subr.bf16.mxu0 0
    %1601 = vmatpush1.bf16.msra.mxu0 %v1555
    %1602 = vmatprep.subr.bf16.mxu0 0
    %1603 = vmatpush1.bf16.msra.mxu0 %v1556
    %1604 = vmatprep.subr.bf16.mxu0 0
    %1605 = vmatpush1.bf16.msra.mxu0 %v1557
    %1606 = vmatprep.mubr.bf16.mxu0 %v1438
    %1607 = vmatmul.mubr.bf16.gmra.mrb[0].mxu0 %v1437
    %v1608 = vpop.f32.mrb[0].mxu0
    %v1609 = vadd.f32 %v1477, %v1608
    %v1610 = vpop.f32.mrb[0].mxu0
    %v1611 = vpop.f32.mrb[0].mxu0
    %v1612 = vadd.f32 %v1477, %v1611
    %v1613 = vpop.f32.mrb[0].mxu0
    %1614 = vmatprep.mubr.bf16.mxu0 %v1440
    %1615 = vmatmul.mubr.bf16.gmra.mrb[0].mxu0 %v1439
    %v1616 = vpop.f32.mrb[0].mxu0
    %v1617 = vadd.f32 %v1477, %v1616
    %v1618 = vpop.f32.mrb[0].mxu0
    %v1619 = vpop.f32.mrb[0].mxu0
    %v1620 = vadd.f32 %v1477, %v1619
    %v1621 = vpop.f32.mrb[0].mxu0
    %1622 = vdwg.mxu0
    %v1623 = vadd.f32 %v1609, %v1262
    %v1624 = vadd.f32 %v1612, %v1263
    %v1625 = vadd.f32 %v1617, %v1264
    %v1626 = vadd.f32 %v1620, %v1265
    %v1627 = vld [vmem:[%s8 + $0x4] sm:$0x1]
    %v1628 = vld [vmem:[%s8 + $0x5] sm:$0x1]
    %1629 = vadd.xlane.f32.xlu0 %v1623
    %v1630 = vpop.xlane.xlu0 %1629
    %1631 = vadd.xlane.f32.xlu0 %v1624
    %v1632 = vpop.xlane.xlu0 %1631
    %1633 = vadd.xlane.f32.xlu0 %v1625
    %v1634 = vpop.xlane.xlu0 %1633
    %1635 = vadd.xlane.f32.xlu0 %v1626
    %v1636 = vpop.xlane.xlu0 %1635
    %v1637 = vmul.f32 %v1630, %v1213
    %v1638 = vmul.f32 %v1632, %v1213
    %v1639 = vmul.f32 %v1634, %v1213
    %v1640 = vmul.f32 %v1636, %v1213
    %v1641 = vsub.f32 %v1623, %v1637
    %v1642 = vsub.f32 %v1624, %v1638
    %v1643 = vsub.f32 %v1625, %v1639
    %v1644 = vsub.f32 %v1626, %v1640
    %v1645 = vmul.f32 %v1641, %v1641
    %v1646 = vmul.f32 %v1642, %v1642
    %v1647 = vmul.f32 %v1643, %v1643
    %v1648 = vmul.f32 %v1644, %v1644
    %1649 = vadd.xlane.f32.xlu0 %v1645
    %v1650 = vpop.xlane.xlu0 %1649
    %1651 = vadd.xlane.f32.xlu0 %v1646
    %v1652 = vpop.xlane.xlu0 %1651
    %1653 = vadd.xlane.f32.xlu0 %v1647
    %v1654 = vpop.xlane.xlu0 %1653
    %1655 = vadd.xlane.f32.xlu0 %v1648
    %v1656 = vpop.xlane.xlu0 %1655
    %v1657 = vmul.f32 %v1650, %v1213
    %v1658 = vmul.f32 %v1652, %v1213
    %v1659 = vmul.f32 %v1654, %v1213
    %v1660 = vmul.f32 %v1656, %v1213
    %v1661 = vadd.f32 %v1657, 1e-05
    %v1662 = vadd.f32 %v1658, 1e-05
    %v1663 = vadd.f32 %v1659, 1e-05
    %v1664 = vadd.f32 %v1660, 1e-05
    %v1665 = vrsqrt.pop %v1661
    %v1666 = vrsqrt.pop %v1662
    %v1667 = vrsqrt.pop %v1663
    %v1668 = vrsqrt.pop %v1664
    %v1669 = vmul.f32 %v1641, %v1665
    %v1670 = vmul.f32 %v1642, %v1666
    %v1671 = vmul.f32 %v1643, %v1667
    %v1672 = vmul.f32 %v1644, %v1668
    %v1673 = vlaneseq
    %v1674 = vshrl.u32 %v1673, 7
    %v1675 = vsub.s32 0, %v1674
    %v1676 = vrot.slane %v1627, %v1675
    %v1677 = vmul.f32 %v1669, %v1676
    %v1678 = vmul.f32 %v1670, %v1676
    %v1679 = vmul.f32 %v1671, %v1676
    %v1680 = vmul.f32 %v1672, %v1676
    %v1681 = vlaneseq
    %v1682 = vshrl.u32 %v1681, 7
    %v1683 = vsub.s32 0, %v1682
    %v1684 = vrot.slane %v1628, %v1683
    %v1685 = vadd.f32 %v1677, %v1684
    %v1686 = vadd.f32 %v1678, %v1684
    %v1687 = vadd.f32 %v1679, %v1684
    %v1688 = vadd.f32 %v1680, %v1684
    %v1689 = vmul.u32 %v523, 8
    %vm1690 = vcmp.eq.s32.totalorder %v106, %v1689
    %v1691 = vsel %vm1690, 1, 0
    %v1692 = vcvt.s32.f32 %v1691
    %v1694 = vsel %vm726, %v1692, 0
    %1696 = vmatprep.subr.mxu0 0.0
    %1697 = vmatpush1.msra.mxu0 %v1685
    %1698 = vmatprep.subr.mxu0 0.0
    %1699 = vmatpush1.msra.mxu0 %v1686
    %1700 = vmatprep.subr.mxu0 0.0
    %1701 = vmatpush1.msra.mxu0 %v1687
    %1702 = vmatprep.subr.mxu0 0.0
    %1703 = vmatpush1.msra.mxu0 %v1688
    %1704 = vmatprep.subr.mxu0 0.0
    %1705 = vmatpush1.msra.mxu0 0.0
    %1706 = vmatprep.subr.mxu0 0.0
    %1707 = vmatpush1.msra.mxu0 0.0
    %1708 = vmatprep.subr.mxu0 0.0
    %1709 = vmatpush1.msra.mxu0 0.0
    %1710 = vmatprep.subr.mxu0 0.0
    %1711 = vmatpush1.msra.mxu0 0.0
    %1712 = vmatprep.subr.mxu0 0.0
    %1713 = vmatpush1.msra.mxu0 0.0
    %1714 = vmatprep.subr.mxu0 0.0
    %1715 = vmatpush1.msra.mxu0 0.0
    %1716 = vmatprep.subr.mxu0 0.0
    %1717 = vmatpush1.msra.mxu0 0.0
    %1718 = vmatprep.subr.mxu0 0.0
    %1719 = vmatpush1.msra.mxu0 0.0
    %1720 = vmatprep.subr.mxu0 0.0
    %1721 = vmatpush1.msra.mxu0 0.0
    %1722 = vmatprep.subr.mxu0 0.0
    %1723 = vmatpush1.msra.mxu0 0.0
    %1724 = vmatprep.subr.mxu0 0.0
    %1725 = vmatpush1.msra.mxu0 0.0
    %1726 = vmatprep.subr.mxu0 0.0
    %1727 = vmatpush1.msra.mxu0 0.0
    %1728 = vmatprep.subr.mxu0 0.0
    %1729 = vmatpush1.msra.mxu0 0.0
    %1730 = vmatprep.subr.mxu0 0.0
    %1731 = vmatpush1.msra.mxu0 0.0
    %1732 = vmatprep.subr.mxu0 0.0
    %1733 = vmatpush1.msra.mxu0 0.0
    %1734 = vmatprep.subr.mxu0 0.0
    %1735 = vmatpush1.msra.mxu0 0.0
    %1736 = vmatprep.subr.mxu0 0.0
    %1737 = vmatpush1.msra.mxu0 0.0
    %1738 = vmatprep.subr.mxu0 0.0
    %1739 = vmatpush1.msra.mxu0 0.0
    %1740 = vmatprep.subr.mxu0 0.0
    %1741 = vmatpush1.msra.mxu0 0.0
    %1742 = vmatprep.subr.mxu0 0.0
    %1743 = vmatpush1.msra.mxu0 0.0
    %1744 = vmatprep.subr.mxu0 0.0
    %1745 = vmatpush1.msra.mxu0 0.0
    %1746 = vmatprep.subr.mxu0 0.0
    %1747 = vmatpush1.msra.mxu0 0.0
    %1748 = vmatprep.subr.mxu0 0.0
    %1749 = vmatpush1.msra.mxu0 0.0
    %1750 = vmatprep.subr.mxu0 0.0
    %1751 = vmatpush1.msra.mxu0 0.0
    %1752 = vmatprep.subr.mxu0 0.0
    %1753 = vmatpush1.msra.mxu0 0.0
    %1754 = vmatprep.subr.mxu0 0.0
    %1755 = vmatpush1.msra.mxu0 0.0
    %1756 = vmatprep.subr.mxu0 0.0
    %1757 = vmatpush1.msra.mxu0 0.0
    %1758 = vmatprep.subr.mxu0 0.0
    %1759 = vmatpush1.msra.mxu0 0.0
    %1760 = vmatprep.mubr.f32.mxu0 0.0
    %1761 = vmatmul.mubr.f32.gmra.mrb[0].mxu0 %v1694
    %v1762 = vpop.f32.mrb[0].mxu0
    %v1763 = vadd.f32 0.0, %v1762
    %v1764 = vpop.f32.mrb[0].mxu0
    %1765 = vdwg.mxu0
    %v1766 = vld [vmem:[%s8 + $0x6] sm:$0x1]
    %v1767 = vld [vmem:[%s8 + $0x7] sm:$0x1]
    %v1768 = vlaneseq
    %v1769 = vshrl.u32 %v1768, 7
    %v1770 = vsub.s32 0, %v1769
    %v1771 = vrot.slane %v1766, %v1770
    %v1772 = vmul.f32 %v1763, %v1771
    %vm1773 = vcmask 1043456
    %v1774 = vsel %vm1773, %v1772, 0.0
    %1775 = vadd.xlane.f32.xlu0 %v1774
    %v1776 = vpop.xlane.xlu0 %1775
    %v1777 = vlaneseq
    %v1778 = vshrl.u32 %v1777, 7
    %v1779 = vsub.s32 0, %v1778
    %v1780 = vrot.slane %v1767, %v1779
    %v1781 = vadd.f32 %v1776, %v1780
    %v1782 = vxor.u32 %v1781, 2147483648
    %v1783 = vmul.f32 %v1782, 1.442695
    %v1784 = vpow.pop %v1783
    %v1785 = vadd.f32 %v1784, 1.0
    %v1786 = vrcp.pop %v1785
    %v1787 = vmul.f32 1.0, %v1786
    %vm1788 = vcmask 3072
    %1789 = vst.msk [vmem:[%s9] sm:$0xf] %vm1788, %v1787
    // Predicated region
    $region58: #{tpu_custom_call.1} parent=1 // pred_check
      _
    $region59: #{tpu_custom_call.1} parent=1 // pred_check_branch
      %1791 = sbr.rel (0) target = $region61
    $region60: #{tpu_custom_call.1} parent=1 // pred_region
      _
    $region61: #{tpu_custom_call.1} parent=1 // pred_fallthru
      _
    // Predicated region
    $region62: #{tpu_custom_call.1} parent=1 // pred_check
      _
    $region63: #{tpu_custom_call.1} parent=1 // pred_check_branch
      %1793 = sbr.rel (0) target = $region65
    $region64: #{tpu_custom_call.1} parent=1 // pred_region
      _
    $region65: #{tpu_custom_call.1} parent=1 // pred_fallthru
      _
    %1794 = vsyncpa [#allocation3], 1
    %1795 = vsyncpa [#allocation5], 1
    %1796 = vsyncpa [#allocation8], 1

</llo_original>
